<compile_context>
chip_gen: v7x
topology: tpu7x:2x2x1
jax: 0.10.0
libtpu: 0.0.40
codegen_flags: <defaults>
</compile_context>

<pallas_src>
import functools
import math

import jax
import jax.numpy as jnp
from jax.experimental import pallas as pl
from jax.experimental.pallas import tpu as pltpu


def _attn_pool_kernel(lens_ref,     # (TB, 1) int32
                      x_ref,        # (TB, S, E) bf16
                      winT_ref,     # (E, 3E) bf16   == in_proj_weight.T (q-scale folded)
                      bin_ref,      # (1, 3E) f32    == in_proj_bias     (q-scale folded)
                      woutT_ref,    # (E, E)  bf16   == out_proj.weight.T
                      bout_ref,     # (1, E)  f32    == out_proj.bias
                      pooled_ref,   # (TB, E) f32 output
                      *opt_attn_ref,  # optionally (TB, S, S) f32 output
                      seq_len, embed_dim, num_heads, block_b, return_attention):
    S, E, H, TB = seq_len, embed_dim, num_heads, block_b
    DH = E // H

    lens = lens_ref[...]                                     # (TB, 1) int32
    x = x_ref[...].reshape(TB * S, E)                        # (TB*S, E) bf16

    # Fused QKV projection: one MXU matmul, bf16 operands / f32 accumulation.
    qkv = jnp.dot(x, winT_ref[...],
                  preferred_element_type=jnp.float32) + bin_ref[...]    # (TB*S, 3E) f32

    q = qkv[:, 0 * E:1 * E].reshape(TB, S, E).astype(jnp.bfloat16)
    k = qkv[:, 1 * E:2 * E].reshape(TB, S, E).astype(jnp.bfloat16)
    v = qkv[:, 2 * E:3 * E].reshape(TB, S, E)                # keep f32 (tiny contraction)

    # key_padding_mask semantics: only KEY positions >= length are masked; all query rows
    # (including padded ones) are computed and pooled, matching the PyTorch module.
    key_valid = (jax.lax.broadcasted_iota(jnp.int32, (TB, 1, S), 2)
                 < lens.reshape(TB, 1, 1))                   # (TB, 1, S)

    attn_acc = None
    ctx_parts = []
    for h in range(H):                                       # H is small and static
        lo, hi = h * DH, (h + 1) * DH
        s_h = jnp.einsum('bqd,bkd->bqk', q[:, :, lo:hi], k[:, :, lo:hi],
                         preferred_element_type=jnp.float32)             # (TB, S, S)
        s_h = jnp.where(key_valid, s_h, -1e30)
        m_h = jnp.max(s_h, axis=-1, keepdims=True)
        e_h = jnp.exp(s_h - m_h)
        denom = jnp.sum(e_h, axis=-1, keepdims=True)
        p_h = e_h * pl.reciprocal(denom, approx=False)       # exact: rows sum to 1

        if return_attention:
            attn_acc = p_h if attn_acc is None else attn_acc + p_h

        # Pooling linearity: sum_q (p_h @ v_h) == (sum_q p_h) @ v_h.
        pbar = jnp.sum(p_h, axis=1, keepdims=True)                        # (TB, 1, S)
        ctx_parts.append(
            jnp.einsum('bqk,bkd->bqd', pbar, v[:, :, lo:hi],
                       preferred_element_type=jnp.float32))               # (TB, 1, DH)

    if return_attention:
        opt_attn_ref[0][...] = attn_acc * (1.0 / H)          # head-averaged attention map

    ctx_sum = jnp.concatenate(ctx_parts, axis=-1).reshape(TB, E)          # (TB, E) f32

    # Folded output projection + pooling: sum_q out = (sum_q ctx) @ Wout^T + S*b_out.
    pooled = jnp.dot(ctx_sum.astype(jnp.bfloat16), woutT_ref[...],
                     preferred_element_type=jnp.float32) + float(S) * bout_ref[...]
    pooled_ref[...] = pooled / lens.astype(jnp.float32)      # exact length divide


def _step_vmem_bytes(tb, S, E, return_attention):
    """Rough per-grid-step VMEM working-set estimate (bytes)."""
    b = 2 * tb * S * E * 2            # x block (bf16, double-buffered)
    b += 2 * tb * E * 4               # pooled block
    b += tb * S * 3 * E * 4           # qkv (f32)
    b += 2 * tb * S * E * 2           # q, k (bf16)
    b += tb * S * E * 4               # v (f32)
    b += 4 * tb * S * S * 4           # scores / exp / p temporaries
    if return_attention:
        b += 2 * tb * S * S * 4       # attn block (double-buffered)
        b += tb * S * S * 4           # head-average accumulator
    return b


def _pick_block_b(B, S, E, return_attention):
    if B <= 8:
        return B
    # Fill the MXU M dimension of the QKV projection: aim for TB*S >= 256.
    tb = 8 * max(1, (((256 + S - 1) // S) + 7) // 8)
    # Cap by a conservative per-step VMEM budget (sized against v7x's 64 MiB VMEM).
    budget = 20 * 1024 * 1024
    while tb > 8 and _step_vmem_bytes(tb, S, E, return_attention) > budget:
        tb -= 8
    bp = 8 * ((B + 7) // 8)
    tb = min(tb, bp)
    # Prefer >= 2 grid steps so ("parallel",) can shard the batch axis across both v7x TCs.
    if bp >= 16:
        tb = min(tb, max(8, 8 * ((bp // 2) // 8)))
    return tb


def _resident_spec(shape):
    # Weights/biases have a constant index_map: a single VMEM buffer is enough.
    try:
        return pl.BlockSpec(shape, lambda i: (0, 0), pipeline_mode=pl.Buffered(1))
    except TypeError:   # compatibility fallback if pipeline_mode is unavailable
        return pl.BlockSpec(shape, lambda i: (0, 0))


def self_attention_pooling(x, lengths, in_proj_w, in_proj_b, out_proj_w, out_proj_b,
                           *, num_heads, block_b=None, return_attention=True):
    """x: (B, S, E), lengths: (B,) int — returns (pooled (B,E), attn (B,S,S))."""
    B, S, E = x.shape
    assert E % num_heads == 0
    DH = E // num_heads
    scale = 1.0 / math.sqrt(DH)

    if block_b is None:
        block_b = _pick_block_b(B, S, E, return_attention)
    TB = block_b
    Bp = ((B + TB - 1) // TB) * TB

    x = x.astype(jnp.bfloat16)                    # bf16 in HBM: halves the x DMA bytes
    lengths = lengths.astype(jnp.int32)
    if Bp != B:
        x = jnp.pad(x, ((0, Bp - B), (0, 0), (0, 0)))
        lengths = jnp.pad(lengths, ((0, Bp - B),), constant_values=1)  # avoid div-by-0
    lens2d = lengths.reshape(Bp, 1)

    # Fold the 1/sqrt(DH) q-scale into the q rows of the packed in-proj weight/bias.
    w = in_proj_w.astype(jnp.float32)
    b = in_proj_b.astype(jnp.float32)
    w = jnp.concatenate([w[:E] * scale, w[E:]], axis=0)
    b = jnp.concatenate([b[:E] * scale, b[E:]], axis=0)
    winT = w.T.astype(jnp.bfloat16)                                   # (E, 3E)
    bin2d = b.reshape(1, 3 * E)
    woutT = out_proj_w.astype(jnp.float32).T.astype(jnp.bfloat16)     # (E, E)
    bout2d = out_proj_b.astype(jnp.float32).reshape(1, E)

    kernel = functools.partial(_attn_pool_kernel, seq_len=S, embed_dim=E,
                               num_heads=num_heads, block_b=TB,
                               return_attention=return_attention)

    if return_attention:
        out_shape = (jax.ShapeDtypeStruct((Bp, E), jnp.float32),
                     jax.ShapeDtypeStruct((Bp, S, S), jnp.float32))
        out_specs = [pl.BlockSpec((TB, E), lambda i: (i, 0)),
                     pl.BlockSpec((TB, S, S), lambda i: (i, 0, 0))]
    else:
        out_shape = jax.ShapeDtypeStruct((Bp, E), jnp.float32)
        out_specs = pl.BlockSpec((TB, E), lambda i: (i, 0))

    weight_bytes = (E * 3 * E + E * E) * 2 + 4 * E * 4
    vmem_limit = int(1.3 * (_step_vmem_bytes(TB, S, E, return_attention) + weight_bytes))
    vmem_limit = max(32 * 1024 * 1024, min(64 * 1024 * 1024, vmem_limit))

    outs = pl.pallas_call(
        kernel,
        out_shape=out_shape,
        grid_spec=pltpu.PrefetchScalarGridSpec(
            num_scalar_prefetch=0,
            grid=(Bp // TB,),
            in_specs=[
                pl.BlockSpec((TB, 1), lambda i: (i, 0)),              # lengths
                pl.BlockSpec((TB, S, E), lambda i: (i, 0, 0)),        # x (bf16)
                _resident_spec((E, 3 * E)),                           # W_in^T (bf16)
                _resident_spec((1, 3 * E)),                           # b_in
                _resident_spec((E, E)),                               # W_out^T (bf16)
                _resident_spec((1, E)),                               # b_out
            ],
            out_specs=out_specs,
        ),
        compiler_params=pltpu.CompilerParams(
            dimension_semantics=("parallel",),
            vmem_limit_bytes=vmem_limit),
    )(lens2d, x, winT, bin2d, woutT, bout2d)

    if return_attention:
        pooled, attn = outs
        return pooled[:B], attn[:B]
    return outs[:B]


def _reference(x, lengths, wi, bi, wo, bo, H):
    """Pure-JAX f32 reference mirroring torch nn.MultiheadAttention + sum/len pooling."""
    B, S, E = x.shape
    DH = E // H
    q = (x @ wi[:E].T + bi[:E]) / math.sqrt(DH)
    k = x @ wi[E:2 * E].T + bi[E:2 * E]
    v = x @ wi[2 * E:].T + bi[2 * E:]
    q = q.reshape(B, S, H, DH).transpose(0, 2, 1, 3)
    k = k.reshape(B, S, H, DH).transpose(0, 2, 1, 3)
    v = v.reshape(B, S, H, DH).transpose(0, 2, 1, 3)
    s = jnp.einsum('bhqd,bhkd->bhqk', q, k)
    mask = jnp.arange(S)[None, None, None, :] < lengths[:, None, None, None]
    s = jnp.where(mask, s, -jnp.inf)
    p = jax.nn.softmax(s, axis=-1)
    ctx = jnp.einsum('bhqk,bhkd->bhqd', p, v)
    ctx = ctx.transpose(0, 2, 1, 3).reshape(B, S, E)
    out = ctx @ wo.T + bo
    pooled = jnp.sum(out, axis=1) / lengths[:, None].astype(jnp.float32)
    attn = jnp.mean(p, axis=1)
    return pooled, attn


if __name__ == "__main__":
    # small shapes consistent with the module's forward
    B, S, E, H = 2, 8, 32, 4

    key = jax.random.PRNGKey(0)
    kx, kw1, kb1, kw2, kb2 = jax.random.split(key, 5)

    x = jax.random.normal(kx, (B, S, E), dtype=jnp.float32)
    lengths = jnp.array([8, 5], dtype=jnp.int32)

    # deterministic parameter init (shapes match nn.MultiheadAttention(E, H))
    in_proj_weight = 0.05 * jax.random.normal(kw1, (3 * E, E), dtype=jnp.float32)
    in_proj_bias = 0.01 * jax.random.normal(kb1, (3 * E,), dtype=jnp.float32)
    out_proj_weight = 0.05 * jax.random.normal(kw2, (E, E), dtype=jnp.float32)
    out_proj_bias = 0.01 * jax.random.normal(kb2, (E,), dtype=jnp.float32)

    pooled, attn = self_attention_pooling(
        x, lengths, in_proj_weight, in_proj_bias, out_proj_weight, out_proj_bias,
        num_heads=H)
    jax.block_until_ready((pooled, attn))

    assert pooled.shape == (B, E)
    assert attn.shape == (B, S, S)
    assert bool(jnp.all(jnp.isfinite(pooled)))
    assert bool(jnp.all(jnp.isfinite(attn)))
    # attention rows sum to ~1 (exact softmax normalization in the kernel)
    assert bool(jnp.all(jnp.abs(jnp.sum(attn, axis=-1) - 1.0) < 1e-3))

    # compare against a pure-JAX f32 reference (bf16 MXU operands -> loose tolerance)
    ref_pooled, ref_attn = _reference(x, lengths, in_proj_weight, in_proj_bias,
                                      out_proj_weight, out_proj_bias, H)
    assert bool(jnp.allclose(pooled, ref_pooled, atol=3e-2, rtol=3e-2))
    assert bool(jnp.allclose(attn, ref_attn, atol=1e-2, rtol=1e-2))

    print("KERNEL_OK")
</pallas_src>

<mosaic_0001>
module attributes {stable_mosaic.version = 11 : i64} {
  func.func @_attn_pool_kernel(%arg0: i32, %arg1: memref<2x1xi32, #tpu.memory_space<vmem>>, %arg2: memref<2x8x32xbf16, #tpu.memory_space<vmem>>, %arg3: memref<32x96xbf16, #tpu.memory_space<vmem>>, %arg4: memref<1x96xf32, #tpu.memory_space<vmem>>, %arg5: memref<32x32xbf16, #tpu.memory_space<vmem>>, %arg6: memref<1x32xf32, #tpu.memory_space<vmem>>, %arg7: memref<2x32xf32, #tpu.memory_space<vmem>>, %arg8: memref<2x8x8xf32, #tpu.memory_space<vmem>>) attributes {dimension_semantics = [#tpu.dimension_semantics<parallel>], iteration_bounds = array<i64: 1>, scalar_prefetch = 0 : i64, scratch_operands = 0 : i64, tpu.core_type = #tpu.core_type<tc>, window_params = [{transform_indices = @transform_0, window_bounds = array<i64: 2, 1>}, {transform_indices = @transform_1, window_bounds = array<i64: 2, 8, 32>}, {pipeline_mode = #tpu.pipeline_mode<synchronous>, transform_indices = @transform_2, window_bounds = array<i64: 32, 96>}, {pipeline_mode = #tpu.pipeline_mode<synchronous>, transform_indices = @transform_3, window_bounds = array<i64: 1, 96>}, {pipeline_mode = #tpu.pipeline_mode<synchronous>, transform_indices = @transform_4, window_bounds = array<i64: 32, 32>}, {pipeline_mode = #tpu.pipeline_mode<synchronous>, transform_indices = @transform_5, window_bounds = array<i64: 1, 32>}, {transform_indices = @transform_6, window_bounds = array<i64: 2, 32>}, {transform_indices = @transform_7, window_bounds = array<i64: 2, 8, 8>}]} {
    %c0 = arith.constant 0 : index
    %c0_0 = arith.constant 0 : index
    %0 = vector.load %arg1[%c0, %c0_0] : memref<2x1xi32, #tpu.memory_space<vmem>>, vector<2x1xi32>
    %c0_1 = arith.constant 0 : index
    %c0_2 = arith.constant 0 : index
    %c0_3 = arith.constant 0 : index
    %1 = vector.load %arg2[%c0_1, %c0_2, %c0_3] : memref<2x8x32xbf16, #tpu.memory_space<vmem>>, vector<2x8x32xbf16>
    %2 = vector.shape_cast %1 : vector<2x8x32xbf16> to vector<16x32xbf16>
    %c0_4 = arith.constant 0 : index
    %c0_5 = arith.constant 0 : index
    %3 = vector.load %arg3[%c0_4, %c0_5] : memref<32x96xbf16, #tpu.memory_space<vmem>>, vector<32x96xbf16>
    %cst = arith.constant dense<0.000000e+00> : vector<16x96xf32>
    %4 = tpu.matmul %2, %3, %cst {dimension_numbers = #tpu.dot_dimension_numbers<[1], [0], [0], [1], [0, 0, 1, 1], [], []>} : vector<16x32xbf16>, vector<32x96xbf16>, vector<16x96xf32> -> vector<16x96xf32>
    %c0_6 = arith.constant 0 : index
    %c0_7 = arith.constant 0 : index
    %5 = vector.load %arg4[%c0_6, %c0_7] : memref<1x96xf32, #tpu.memory_space<vmem>>, vector<1x96xf32>
    %6 = vector.broadcast %5 : vector<1x96xf32> to vector<16x96xf32>
    %7 = arith.addf %4, %6 : vector<16x96xf32>
    %8 = vector.extract_strided_slice %7 {offsets = [0, 0], sizes = [16, 32], strides = [1, 1]} : vector<16x96xf32> to vector<16x32xf32>
    %9 = vector.shape_cast %8 : vector<16x32xf32> to vector<2x8x32xf32>
    %10 = arith.truncf %9 : vector<2x8x32xf32> to vector<2x8x32xbf16>
    %11 = vector.extract_strided_slice %7 {offsets = [0, 32], sizes = [16, 32], strides = [1, 1]} : vector<16x96xf32> to vector<16x32xf32>
    %12 = vector.shape_cast %11 : vector<16x32xf32> to vector<2x8x32xf32>
    %13 = arith.truncf %12 : vector<2x8x32xf32> to vector<2x8x32xbf16>
    %14 = vector.extract_strided_slice %7 {offsets = [0, 64], sizes = [16, 32], strides = [1, 1]} : vector<16x96xf32> to vector<16x32xf32>
    %15 = vector.shape_cast %14 : vector<16x32xf32> to vector<2x8x32xf32>
    %16 = tpu.iota {dimensions = array<i32: 2>} : vector<2x1x8xi32>
    %17 = vector.shape_cast %0 : vector<2x1xi32> to vector<2x1x1xi32>
    %18 = vector.broadcast %17 : vector<2x1x1xi32> to vector<2x1x8xi32>
    %19 = arith.cmpi slt, %16, %18 : vector<2x1x8xi32>
    %20 = vector.extract_strided_slice %10 {offsets = [0, 0, 0], sizes = [2, 8, 8], strides = [1, 1, 1]} : vector<2x8x32xbf16> to vector<2x8x8xbf16>
    %21 = vector.extract_strided_slice %13 {offsets = [0, 0, 0], sizes = [2, 8, 8], strides = [1, 1, 1]} : vector<2x8x32xbf16> to vector<2x8x8xbf16>
    "tpu.trace_start"() <{level = 10 : i32, message = "bqd,bkd->bqk"}> : () -> ()
    %cst_8 = arith.constant dense<0.000000e+00> : vector<2x8x8xf32>
    %22 = tpu.matmul %20, %21, %cst_8 {dimension_numbers = #tpu.dot_dimension_numbers<[2], [2], [1], [1], [0, 0, 0, 1, 1, 1], [0], [0]>} : vector<2x8x8xbf16>, vector<2x8x8xbf16>, vector<2x8x8xf32> -> vector<2x8x8xf32>
    %cst_9 = arith.constant -1.000000e+30 : f32
    "tpu.trace_stop"() : () -> ()
    %23 = vector.shape_cast %19 : vector<2x1x8xi1> to vector<2x1x8xi1>
    %24 = vector.broadcast %23 : vector<2x1x8xi1> to vector<2x8x8xi1>
    %25 = vector.broadcast %cst_9 : f32 to vector<2x8x8xf32>
    %26 = arith.select %24, %22, %25 : vector<2x8x8xi1>, vector<2x8x8xf32>
    %cst_10 = arith.constant dense<0xFF800000> : vector<2x8xf32>
    %27 = vector.multi_reduction <maximumf>, %26, %cst_10 [2] : vector<2x8x8xf32> to vector<2x8xf32>
    %28 = vector.shape_cast %27 : vector<2x8xf32> to vector<2x8x1xf32>
    %29 = vector.broadcast %28 : vector<2x8x1xf32> to vector<2x8x8xf32>
    %30 = arith.subf %26, %29 : vector<2x8x8xf32>
    %31 = math.exp %30 : vector<2x8x8xf32>
    %cst_11 = arith.constant dense<0.000000e+00> : vector<2x8xf32>
    %32 = vector.multi_reduction <add>, %31, %cst_11 [2] : vector<2x8x8xf32> to vector<2x8xf32>
    %33 = vector.shape_cast %32 : vector<2x8xf32> to vector<2x8x1xf32>
    %34 = tpu.reciprocal %33 : vector<2x8x1xf32> -> vector<2x8x1xf32>
    %35 = vector.broadcast %34 : vector<2x8x1xf32> to vector<2x8x8xf32>
    %36 = arith.mulf %31, %35 : vector<2x8x8xf32>
    %cst_12 = arith.constant dense<0.000000e+00> : vector<2x8xf32>
    %37 = vector.multi_reduction <add>, %36, %cst_12 [1] : vector<2x8x8xf32> to vector<2x8xf32>
    %38 = vector.shape_cast %37 : vector<2x8xf32> to vector<2x1x8xf32>
    %39 = vector.extract_strided_slice %15 {offsets = [0, 0, 0], sizes = [2, 8, 8], strides = [1, 1, 1]} : vector<2x8x32xf32> to vector<2x8x8xf32>
    "tpu.trace_start"() <{level = 10 : i32, message = "bqk,bkd->bqd"}> : () -> ()
    %cst_13 = arith.constant dense<0.000000e+00> : vector<2x1x8xf32>
    %40 = tpu.matmul %38, %39, %cst_13 {dimension_numbers = #tpu.dot_dimension_numbers<[2], [1], [1], [2], [0, 0, 0, 1, 1, 2], [0], [0]>} : vector<2x1x8xf32>, vector<2x8x8xf32>, vector<2x1x8xf32> -> vector<2x1x8xf32>
    "tpu.trace_stop"() : () -> ()
    %41 = vector.extract_strided_slice %10 {offsets = [0, 0, 8], sizes = [2, 8, 8], strides = [1, 1, 1]} : vector<2x8x32xbf16> to vector<2x8x8xbf16>
    %42 = vector.extract_strided_slice %13 {offsets = [0, 0, 8], sizes = [2, 8, 8], strides = [1, 1, 1]} : vector<2x8x32xbf16> to vector<2x8x8xbf16>
    "tpu.trace_start"() <{level = 10 : i32, message = "bqd,bkd->bqk"}> : () -> ()
    %cst_14 = arith.constant dense<0.000000e+00> : vector<2x8x8xf32>
    %43 = tpu.matmul %41, %42, %cst_14 {dimension_numbers = #tpu.dot_dimension_numbers<[2], [2], [1], [1], [0, 0, 0, 1, 1, 1], [0], [0]>} : vector<2x8x8xbf16>, vector<2x8x8xbf16>, vector<2x8x8xf32> -> vector<2x8x8xf32>
    %cst_15 = arith.constant -1.000000e+30 : f32
    "tpu.trace_stop"() : () -> ()
    %44 = vector.shape_cast %19 : vector<2x1x8xi1> to vector<2x1x8xi1>
    %45 = vector.broadcast %44 : vector<2x1x8xi1> to vector<2x8x8xi1>
    %46 = vector.broadcast %cst_15 : f32 to vector<2x8x8xf32>
    %47 = arith.select %45, %43, %46 : vector<2x8x8xi1>, vector<2x8x8xf32>
    %cst_16 = arith.constant dense<0xFF800000> : vector<2x8xf32>
    %48 = vector.multi_reduction <maximumf>, %47, %cst_16 [2] : vector<2x8x8xf32> to vector<2x8xf32>
    %49 = vector.shape_cast %48 : vector<2x8xf32> to vector<2x8x1xf32>
    %50 = vector.broadcast %49 : vector<2x8x1xf32> to vector<2x8x8xf32>
    %51 = arith.subf %47, %50 : vector<2x8x8xf32>
    %52 = math.exp %51 : vector<2x8x8xf32>
    %cst_17 = arith.constant dense<0.000000e+00> : vector<2x8xf32>
    %53 = vector.multi_reduction <add>, %52, %cst_17 [2] : vector<2x8x8xf32> to vector<2x8xf32>
    %54 = vector.shape_cast %53 : vector<2x8xf32> to vector<2x8x1xf32>
    %55 = tpu.reciprocal %54 : vector<2x8x1xf32> -> vector<2x8x1xf32>
    %56 = vector.broadcast %55 : vector<2x8x1xf32> to vector<2x8x8xf32>
    %57 = arith.mulf %52, %56 : vector<2x8x8xf32>
    %58 = arith.addf %36, %57 : vector<2x8x8xf32>
    %cst_18 = arith.constant dense<0.000000e+00> : vector<2x8xf32>
    %59 = vector.multi_reduction <add>, %57, %cst_18 [1] : vector<2x8x8xf32> to vector<2x8xf32>
    %60 = vector.shape_cast %59 : vector<2x8xf32> to vector<2x1x8xf32>
    %61 = vector.extract_strided_slice %15 {offsets = [0, 0, 8], sizes = [2, 8, 8], strides = [1, 1, 1]} : vector<2x8x32xf32> to vector<2x8x8xf32>
    "tpu.trace_start"() <{level = 10 : i32, message = "bqk,bkd->bqd"}> : () -> ()
    %cst_19 = arith.constant dense<0.000000e+00> : vector<2x1x8xf32>
    %62 = tpu.matmul %60, %61, %cst_19 {dimension_numbers = #tpu.dot_dimension_numbers<[2], [1], [1], [2], [0, 0, 0, 1, 1, 2], [0], [0]>} : vector<2x1x8xf32>, vector<2x8x8xf32>, vector<2x1x8xf32> -> vector<2x1x8xf32>
    "tpu.trace_stop"() : () -> ()
    %63 = vector.extract_strided_slice %10 {offsets = [0, 0, 16], sizes = [2, 8, 8], strides = [1, 1, 1]} : vector<2x8x32xbf16> to vector<2x8x8xbf16>
    %64 = vector.extract_strided_slice %13 {offsets = [0, 0, 16], sizes = [2, 8, 8], strides = [1, 1, 1]} : vector<2x8x32xbf16> to vector<2x8x8xbf16>
    "tpu.trace_start"() <{level = 10 : i32, message = "bqd,bkd->bqk"}> : () -> ()
    %cst_20 = arith.constant dense<0.000000e+00> : vector<2x8x8xf32>
    %65 = tpu.matmul %63, %64, %cst_20 {dimension_numbers = #tpu.dot_dimension_numbers<[2], [2], [1], [1], [0, 0, 0, 1, 1, 1], [0], [0]>} : vector<2x8x8xbf16>, vector<2x8x8xbf16>, vector<2x8x8xf32> -> vector<2x8x8xf32>
    %cst_21 = arith.constant -1.000000e+30 : f32
    "tpu.trace_stop"() : () -> ()
    %66 = vector.shape_cast %19 : vector<2x1x8xi1> to vector<2x1x8xi1>
    %67 = vector.broadcast %66 : vector<2x1x8xi1> to vector<2x8x8xi1>
    %68 = vector.broadcast %cst_21 : f32 to vector<2x8x8xf32>
    %69 = arith.select %67, %65, %68 : vector<2x8x8xi1>, vector<2x8x8xf32>
    %cst_22 = arith.constant dense<0xFF800000> : vector<2x8xf32>
    %70 = vector.multi_reduction <maximumf>, %69, %cst_22 [2] : vector<2x8x8xf32> to vector<2x8xf32>
    %71 = vector.shape_cast %70 : vector<2x8xf32> to vector<2x8x1xf32>
    %72 = vector.broadcast %71 : vector<2x8x1xf32> to vector<2x8x8xf32>
    %73 = arith.subf %69, %72 : vector<2x8x8xf32>
    %74 = math.exp %73 : vector<2x8x8xf32>
    %cst_23 = arith.constant dense<0.000000e+00> : vector<2x8xf32>
    %75 = vector.multi_reduction <add>, %74, %cst_23 [2] : vector<2x8x8xf32> to vector<2x8xf32>
    %76 = vector.shape_cast %75 : vector<2x8xf32> to vector<2x8x1xf32>
    %77 = tpu.reciprocal %76 : vector<2x8x1xf32> -> vector<2x8x1xf32>
    %78 = vector.broadcast %77 : vector<2x8x1xf32> to vector<2x8x8xf32>
    %79 = arith.mulf %74, %78 : vector<2x8x8xf32>
    %80 = arith.addf %58, %79 : vector<2x8x8xf32>
    %cst_24 = arith.constant dense<0.000000e+00> : vector<2x8xf32>
    %81 = vector.multi_reduction <add>, %79, %cst_24 [1] : vector<2x8x8xf32> to vector<2x8xf32>
    %82 = vector.shape_cast %81 : vector<2x8xf32> to vector<2x1x8xf32>
    %83 = vector.extract_strided_slice %15 {offsets = [0, 0, 16], sizes = [2, 8, 8], strides = [1, 1, 1]} : vector<2x8x32xf32> to vector<2x8x8xf32>
    "tpu.trace_start"() <{level = 10 : i32, message = "bqk,bkd->bqd"}> : () -> ()
    %cst_25 = arith.constant dense<0.000000e+00> : vector<2x1x8xf32>
    %84 = tpu.matmul %82, %83, %cst_25 {dimension_numbers = #tpu.dot_dimension_numbers<[2], [1], [1], [2], [0, 0, 0, 1, 1, 2], [0], [0]>} : vector<2x1x8xf32>, vector<2x8x8xf32>, vector<2x1x8xf32> -> vector<2x1x8xf32>
    "tpu.trace_stop"() : () -> ()
    %85 = vector.extract_strided_slice %10 {offsets = [0, 0, 24], sizes = [2, 8, 8], strides = [1, 1, 1]} : vector<2x8x32xbf16> to vector<2x8x8xbf16>
    %86 = vector.extract_strided_slice %13 {offsets = [0, 0, 24], sizes = [2, 8, 8], strides = [1, 1, 1]} : vector<2x8x32xbf16> to vector<2x8x8xbf16>
    "tpu.trace_start"() <{level = 10 : i32, message = "bqd,bkd->bqk"}> : () -> ()
    %cst_26 = arith.constant dense<0.000000e+00> : vector<2x8x8xf32>
    %87 = tpu.matmul %85, %86, %cst_26 {dimension_numbers = #tpu.dot_dimension_numbers<[2], [2], [1], [1], [0, 0, 0, 1, 1, 1], [0], [0]>} : vector<2x8x8xbf16>, vector<2x8x8xbf16>, vector<2x8x8xf32> -> vector<2x8x8xf32>
    %cst_27 = arith.constant -1.000000e+30 : f32
    "tpu.trace_stop"() : () -> ()
    %88 = vector.shape_cast %19 : vector<2x1x8xi1> to vector<2x1x8xi1>
    %89 = vector.broadcast %88 : vector<2x1x8xi1> to vector<2x8x8xi1>
    %90 = vector.broadcast %cst_27 : f32 to vector<2x8x8xf32>
    %91 = arith.select %89, %87, %90 : vector<2x8x8xi1>, vector<2x8x8xf32>
    %cst_28 = arith.constant dense<0xFF800000> : vector<2x8xf32>
    %92 = vector.multi_reduction <maximumf>, %91, %cst_28 [2] : vector<2x8x8xf32> to vector<2x8xf32>
    %93 = vector.shape_cast %92 : vector<2x8xf32> to vector<2x8x1xf32>
    %94 = vector.broadcast %93 : vector<2x8x1xf32> to vector<2x8x8xf32>
    %95 = arith.subf %91, %94 : vector<2x8x8xf32>
    %96 = math.exp %95 : vector<2x8x8xf32>
    %cst_29 = arith.constant dense<0.000000e+00> : vector<2x8xf32>
    %97 = vector.multi_reduction <add>, %96, %cst_29 [2] : vector<2x8x8xf32> to vector<2x8xf32>
    %98 = vector.shape_cast %97 : vector<2x8xf32> to vector<2x8x1xf32>
    %99 = tpu.reciprocal %98 : vector<2x8x1xf32> -> vector<2x8x1xf32>
    %100 = vector.broadcast %99 : vector<2x8x1xf32> to vector<2x8x8xf32>
    %101 = arith.mulf %96, %100 : vector<2x8x8xf32>
    %102 = arith.addf %80, %101 : vector<2x8x8xf32>
    %cst_30 = arith.constant dense<0.000000e+00> : vector<2x8xf32>
    %103 = vector.multi_reduction <add>, %101, %cst_30 [1] : vector<2x8x8xf32> to vector<2x8xf32>
    %104 = vector.shape_cast %103 : vector<2x8xf32> to vector<2x1x8xf32>
    %105 = vector.extract_strided_slice %15 {offsets = [0, 0, 24], sizes = [2, 8, 8], strides = [1, 1, 1]} : vector<2x8x32xf32> to vector<2x8x8xf32>
    "tpu.trace_start"() <{level = 10 : i32, message = "bqk,bkd->bqd"}> : () -> ()
    %cst_31 = arith.constant dense<0.000000e+00> : vector<2x1x8xf32>
    %106 = tpu.matmul %104, %105, %cst_31 {dimension_numbers = #tpu.dot_dimension_numbers<[2], [1], [1], [2], [0, 0, 0, 1, 1, 2], [0], [0]>} : vector<2x1x8xf32>, vector<2x8x8xf32>, vector<2x1x8xf32> -> vector<2x1x8xf32>
    "tpu.trace_stop"() : () -> ()
    %cst_32 = arith.constant 2.500000e-01 : f32
    %107 = vector.broadcast %cst_32 : f32 to vector<2x8x8xf32>
    %108 = arith.mulf %102, %107 : vector<2x8x8xf32>
    %c0_33 = arith.constant 0 : index
    %c0_34 = arith.constant 0 : index
    %c0_35 = arith.constant 0 : index
    %109 = vector.load %arg8[%c0_33, %c0_34, %c0_35] : memref<2x8x8xf32, #tpu.memory_space<vmem>>, vector<2x8x8xf32>
    tpu.vector_store %arg8[%c0_33, %c0_34, %c0_35], %108 {strides = array<i32>} : memref<2x8x8xf32, #tpu.memory_space<vmem>>, vector<2x8x8xf32>,
    %110 = tpu.concatenate %40, %62, %84, %106 in 2 : vector<2x1x8xf32>, vector<2x1x8xf32>, vector<2x1x8xf32>, vector<2x1x8xf32> -> vector<2x1x32xf32>
    %111 = vector.shape_cast %110 : vector<2x1x32xf32> to vector<2x32xf32>
    %112 = arith.truncf %111 : vector<2x32xf32> to vector<2x32xbf16>
    %c0_36 = arith.constant 0 : index
    %c0_37 = arith.constant 0 : index
    %113 = vector.load %arg5[%c0_36, %c0_37] : memref<32x32xbf16, #tpu.memory_space<vmem>>, vector<32x32xbf16>
    %cst_38 = arith.constant dense<0.000000e+00> : vector<2x32xf32>
    %114 = tpu.matmul %112, %113, %cst_38 {dimension_numbers = #tpu.dot_dimension_numbers<[1], [0], [0], [1], [0, 0, 1, 1], [], []>} : vector<2x32xbf16>, vector<32x32xbf16>, vector<2x32xf32> -> vector<2x32xf32>
    %c0_39 = arith.constant 0 : index
    %c0_40 = arith.constant 0 : index
    %115 = vector.load %arg6[%c0_39, %c0_40] : memref<1x32xf32, #tpu.memory_space<vmem>>, vector<1x32xf32>
    %cst_41 = arith.constant 8.000000e+00 : f32
    %116 = vector.broadcast %cst_41 : f32 to vector<1x32xf32>
    %117 = arith.mulf %116, %115 : vector<1x32xf32>
    %118 = vector.broadcast %117 : vector<1x32xf32> to vector<2x32xf32>
    %119 = arith.addf %114, %118 : vector<2x32xf32>
    %120 = arith.sitofp %0 : vector<2x1xi32> to vector<2x1xf32>
    %121 = vector.broadcast %120 : vector<2x1xf32> to vector<2x32xf32>
    %122 = arith.divf %119, %121 : vector<2x32xf32>
    %c0_42 = arith.constant 0 : index
    %c0_43 = arith.constant 0 : index
    %123 = vector.load %arg7[%c0_42, %c0_43] : memref<2x32xf32, #tpu.memory_space<vmem>>, vector<2x32xf32>
    tpu.vector_store %arg7[%c0_42, %c0_43], %122 {strides = array<i32>} : memref<2x32xf32, #tpu.memory_space<vmem>>, vector<2x32xf32>,
    return
  }
  func.func @transform_0(%arg0: i32) -> (i32, i32) {
    %c0_i32 = arith.constant 0 : i32
    %c0_i32_0 = arith.constant 0 : i32
    return %arg0, %c0_i32 : i32, i32
  }
  func.func @transform_1(%arg0: i32) -> (i32, i32, i32) {
    %c0_i32 = arith.constant 0 : i32
    %c0_i32_0 = arith.constant 0 : i32
    %c0_i32_1 = arith.constant 0 : i32
    return %arg0, %c0_i32, %c0_i32_0 : i32, i32, i32
  }
  func.func @transform_2(%arg0: i32) -> (i32, i32) {
    %c0_i32 = arith.constant 0 : i32
    %c0_i32_0 = arith.constant 0 : i32
    %c0_i32_1 = arith.constant 0 : i32
    return %c0_i32, %c0_i32_0 : i32, i32
  }
  func.func @transform_3(%arg0: i32) -> (i32, i32) {
    %c0_i32 = arith.constant 0 : i32
    %c0_i32_0 = arith.constant 0 : i32
    %c0_i32_1 = arith.constant 0 : i32
    return %c0_i32, %c0_i32_0 : i32, i32
  }
  func.func @transform_4(%arg0: i32) -> (i32, i32) {
    %c0_i32 = arith.constant 0 : i32
    %c0_i32_0 = arith.constant 0 : i32
    %c0_i32_1 = arith.constant 0 : i32
    return %c0_i32, %c0_i32_0 : i32, i32
  }
  func.func @transform_5(%arg0: i32) -> (i32, i32) {
    %c0_i32 = arith.constant 0 : i32
    %c0_i32_0 = arith.constant 0 : i32
    %c0_i32_1 = arith.constant 0 : i32
    return %c0_i32, %c0_i32_0 : i32, i32
  }
  func.func @transform_6(%arg0: i32) -> (i32, i32) {
    %c0_i32 = arith.constant 0 : i32
    %c0_i32_0 = arith.constant 0 : i32
    return %arg0, %c0_i32 : i32, i32
  }
  func.func @transform_7(%arg0: i32) -> (i32, i32, i32) {
    %c0_i32 = arith.constant 0 : i32
    %c0_i32_0 = arith.constant 0 : i32
    %c0_i32_1 = arith.constant 0 : i32
    return %arg0, %c0_i32, %c0_i32_0 : i32, i32, i32
  }
}

</mosaic_0001>

<llo_original>
// kernel: tpu_custom_call.1
$region0: #{tpu_custom_call.1}
  #allocation0 [shape = 'u32[]', space=smem, size = 0x4, offset = 0x4, fixed_abs, tag = 'smem constant byte address 0x4 - core index']
  #allocation1 [shape = 'u32[144,128]{1,0:T(1,128)}', space=vmem, size = 0x12000, scoped, tag = 'internal scratch']
  %s0 = inlined_call_operand.vmem [shape: s32[2,1], index: 0, kind: input, shape index: {}]
  %s1 = inlined_call_operand.hbm [shape: bf16[2,8,32], index: 1, kind: input, shape index: {}]
  %s2 = inlined_call_operand.hbm [shape: bf16[32,96], index: 2, kind: input, shape index: {}]
  %s3 = inlined_call_operand.vmem [shape: f32[1,96], index: 3, kind: input, shape index: {}]
  %s4 = inlined_call_operand.vmem [shape: bf16[32,32], index: 4, kind: input, shape index: {}]
  %s5 = inlined_call_operand.vmem [shape: f32[1,32], index: 5, kind: input, shape index: {}]
  %s6 = inlined_call_operand.hbm [shape: f32[2,32], index: 6, kind: output, shape index: {0}]
  %s7 = inlined_call_operand.hbm [shape: f32[2,8,8], index: 7, kind: output, shape index: {1}]
  %8 = xla_tuple %s6, %s7
  %s9 = sld [smem:[#allocation0]]
  $region50: #{tpu_custom_call.1} parent=0
    _
  %s11 = ssub.s32 1, %s9
  %s12 = scalar_select 0, %s11, %s9
  $region1: #{tpu_custom_call.1} parent=0
    #allocation2 [shape = 'u8[4096]{0}', space=vmem, size = 0x1000, scoped, tag = 'input window, operand 1, single buffered']
    #allocation3 [shape = 's32[1]{0}', space=sflag, size = 0x4, scoped, tag = 'scoped memory for tpu_custom_call.1']
    #allocation4 [shape = 's32[1]{0}', space=sflag, size = 0x4, scoped, tag = 'scoped memory for tpu_custom_call.1']
    #allocation5 [shape = 'u8[8192]{0}', space=vmem, size = 0x2000, scoped, tag = 'input window, operand 2, single buffered']
    #allocation6 [shape = 's32[1]{0}', space=sflag, size = 0x4, scoped, tag = 'scoped memory for tpu_custom_call.1']
    #allocation7 [shape = 'u8[1024]{0}', space=vmem, size = 0x400, scoped, tag = 'output window, operand 0, single buffered']
    #allocation8 [shape = 'u8[8192]{0}', space=vmem, size = 0x2000, scoped, tag = 'output window, operand 1, single buffered']
    #allocation9 [shape = 's32[1]{0}', space=sflag, size = 0x4, scoped, tag = 'scoped memory for tpu_custom_call.1']
    %13 = vsyncpa [#allocation3], 0
    %14 = vsyncpa [#allocation6], 0
    %15 = vsyncpa [#allocation4], 0
    %16 = vsyncpa [#allocation9], 0
    // Predicated region
    $region2: #{tpu_custom_call.1} parent=1 // pred_check
      _
    $region3: #{tpu_custom_call.1} parent=1 // pred_check_branch
      %18 = sbr.rel (0) target = $region5
    $region4: #{tpu_custom_call.1} parent=1 // pred_region
      _
    $region5: #{tpu_custom_call.1} parent=1 // pred_fallthru
      _
    // Predicated region
    $region6: #{tpu_custom_call.1} parent=1 // pred_check
      _
    $region7: #{tpu_custom_call.1} parent=1 // pred_check_branch
      %20 = sbr.rel (0) target = $region9
    $region8: #{tpu_custom_call.1} parent=1 // pred_region
      %s22 = ssub.s32 128, 128
      %23 = vsyncadd [#allocation3], %s22
      %s24 = sshll.u32 [#allocation2], 4
      %s25 = int_to_ptr.vmem [resolvable:$true] %s24
      %30 = dma.hbm_to_vmem [thread:$0]  %s1, 128, %s25, [#allocation3], 64, 64, 4
    $region9: #{tpu_custom_call.1} parent=1 // pred_fallthru
      _
    // Predicated region
    $region10: #{tpu_custom_call.1} parent=1 // pred_check
      _
    $region11: #{tpu_custom_call.1} parent=1 // pred_check_branch
      %32 = sbr.rel (0) target = $region13
    $region12: #{tpu_custom_call.1} parent=1 // pred_region
      %s34 = ssub.s32 256, 256
      %35 = vsyncadd [#allocation6], %s34
      %s36 = sshll.u32 [#allocation5], 4
      %s37 = int_to_ptr.vmem [resolvable:$true] %s36
      %42 = dma.hbm_to_vmem [thread:$0]  %s2, 256, %s37, [#allocation6], 64, 64, 4
    $region13: #{tpu_custom_call.1} parent=1 // pred_fallthru
      _
    // Predicated region
    $region14: #{tpu_custom_call.1} parent=1 // pred_check
      _
    $region15: #{tpu_custom_call.1} parent=1 // pred_check_branch
      %44 = sbr.rel (0) target = $region17
    $region16: #{tpu_custom_call.1} parent=1 // pred_region
      _
    $region17: #{tpu_custom_call.1} parent=1 // pred_fallthru
      _
    // Predicated region
    $region18: #{tpu_custom_call.1} parent=1 // pred_check
      _
    $region19: #{tpu_custom_call.1} parent=1 // pred_check_branch
      %46 = sbr.rel (0) target = $region21
    $region20: #{tpu_custom_call.1} parent=1 // pred_region
      _
    $region21: #{tpu_custom_call.1} parent=1 // pred_fallthru
      _
    // Predicated region
    $region22: #{tpu_custom_call.1} parent=1 // pred_check
      _
    $region23: #{tpu_custom_call.1} parent=1 // pred_check_branch
      %48 = sbr.rel (0) target = $region25
    $region24: #{tpu_custom_call.1} parent=1 // pred_region
      _
    $region25: #{tpu_custom_call.1} parent=1 // pred_fallthru
      _
    // Predicated region
    $region26: #{tpu_custom_call.1} parent=1 // pred_check
      _
    $region27: #{tpu_custom_call.1} parent=1 // pred_check_branch
      %50 = sbr.rel (0) target = $region29
    $region28: #{tpu_custom_call.1} parent=1 // pred_region
      %51 = dma.done [#allocation3], 128
    $region29: #{tpu_custom_call.1} parent=1 // pred_fallthru
      _
    // Predicated region
    $region30: #{tpu_custom_call.1} parent=1 // pred_check
      _
    $region31: #{tpu_custom_call.1} parent=1 // pred_check_branch
      %53 = sbr.rel (0) target = $region33
    $region32: #{tpu_custom_call.1} parent=1 // pred_region
      %54 = dma.done [#allocation6], 256
    $region33: #{tpu_custom_call.1} parent=1 // pred_fallthru
      _
    %v56 = vld [vmem:[%s0] sm:$0x3]
    %v57 = vld [vmem:[#allocation2] sm:$0xf]
    %v58 = vld [vmem:[#allocation2 + $0x4] sm:$0xf]
    %v59 = vld [vmem:[#allocation5] sm:$0xf]
    %v60 = vld [vmem:[#allocation5 + $0x4] sm:$0xf]
    %v61 = vld [vmem:[#allocation5 + $0x8] sm:$0xf]
    %v62 = vld [vmem:[#allocation5 + $0xc] sm:$0xf]
    %v63 = vld [vmem:[%s3] sm:$0x1]
    %v65 = vlaneseq
    %v66 = vshrl.u32 %v65, 7
    %v67 = vsub.s32 0, %v66
    %v68 = vrot.slane %v63, %v67
    %v72 = vunpack.c.l.b16 %v57
    %v73 = vunpack.c.l.b16 %v58
    %v74 = vpack.c.b16 %v73, %v72
    %v79 = vunpack.c.l.b16 %v59
    %v80 = vunpack.c.l.b16 %v60
    %v81 = vunpack.c.l.b16 %v61
    %v82 = vunpack.c.l.b16 %v62
    %v83 = vpack.c.b16 %v80, %v79
    %v84 = vpack.c.b16 %v82, %v81
    %vm87 = vcmask 261120
    %v89 = vsel %vm87, %v74, 0
    %91 = vmatprep.subr.bf16.mxu0 0
    %92 = vmatpush1.bf16.msra.mxu0 %v83
    %93 = vmatprep.subr.bf16.mxu0 0
    %94 = vmatpush1.bf16.msra.mxu0 %v84
    %95 = vmatprep.subr.bf16.mxu0 0
    %96 = vmatpush1.bf16.msra.mxu0 0
    %97 = vmatprep.subr.bf16.mxu0 0
    %98 = vmatpush1.bf16.msra.mxu0 0
    %99 = vmatprep.subr.bf16.mxu0 0
    %100 = vmatpush1.bf16.msra.mxu0 0
    %101 = vmatprep.subr.bf16.mxu0 0
    %102 = vmatpush1.bf16.msra.mxu0 0
    %103 = vmatprep.subr.bf16.mxu0 0
    %104 = vmatpush1.bf16.msra.mxu0 0
    %105 = vmatprep.subr.bf16.mxu0 0
    %106 = vmatpush1.bf16.msra.mxu0 0
    %107 = vmatprep.subr.bf16.mxu0 0
    %108 = vmatpush1.bf16.msra.mxu0 0
    %109 = vmatprep.subr.bf16.mxu0 0
    %110 = vmatpush1.bf16.msra.mxu0 0
    %111 = vmatprep.subr.bf16.mxu0 0
    %112 = vmatpush1.bf16.msra.mxu0 0
    %113 = vmatprep.subr.bf16.mxu0 0
    %114 = vmatpush1.bf16.msra.mxu0 0
    %115 = vmatprep.subr.bf16.mxu0 0
    %116 = vmatpush1.bf16.msra.mxu0 0
    %117 = vmatprep.subr.bf16.mxu0 0
    %118 = vmatpush1.bf16.msra.mxu0 0
    %119 = vmatprep.subr.bf16.mxu0 0
    %120 = vmatpush1.bf16.msra.mxu0 0
    %121 = vmatprep.subr.bf16.mxu0 0
    %122 = vmatpush1.bf16.msra.mxu0 0
    %123 = vmatprep.mubr.bf16.mxu0 0
    %124 = vmatmul.mubr.bf16.gmra.mrb[0].mxu0 %v89
    %v125 = vpop.f32.mrb[0].mxu0
    %v126 = vadd.f32 %v68, %v125
    %v127 = vpop.f32.mrb[0].mxu0
    %v128 = vpop.f32.mrb[0].mxu0
    %v129 = vadd.f32 %v68, %v128
    %v130 = vpop.f32.mrb[0].mxu0
    %131 = vdwg.mxu0
    %v132 = vpack.c.bf16 %v126, %v126
    %v133 = vpack.c.bf16 %v129, %v129
    %v134 = vlaneseq
    %v135 = vand.u32 %v134, 127
    %v137 = vunpack.c.l.s4 1966171168
    %v138 = vunpack.c.0.s8 %v137
    %v139 = vlaneseq
    %v140 = vshrl.u32 %v139, 7
    %v141 = vsub.s32 %v138, %v140
    %v142 = vrot.slane %v56, %v141
    %v143 = vcombine.high %v142, %v142
    %v145 = vunpack.c.l.s4 1966171168
    %v146 = vunpack.c.0.s8 %v145
    %v147 = vlaneseq
    %v148 = vshrl.u32 %v147, 7
    %v149 = vsub.s32 %v146, %v148
    %v150 = vrot.slane %v142, %v149
    %v152 = vunpack.c.l.s4 1966171168
    %v153 = vunpack.c.0.s8 %v152
    %v154 = vlaneseq
    %v155 = vshrl.u32 %v154, 7
    %v156 = vsub.s32 %v153, %v155
    %v157 = vrot.slane %v143, %v156
    %158 = vset.pattern.permute.xlu0 0
    %159 = vperm.xlu0 %158, %v150
    %v160 = vpop.permute.xlu0 %159
    %v161 = vlaneseq
    %v162 = vshrl.u32 %v161, 7
    %v163 = vsub.s32 0, %v162
    %v164 = vrot.slane %v160, %v163
    %165 = vset.pattern.permute.xlu0 0
    %166 = vperm.xlu0 %165, %v157
    %v167 = vpop.permute.xlu0 %166
    %v168 = vlaneseq
    %v169 = vshrl.u32 %v168, 7
    %v170 = vsub.s32 0, %v169
    %v171 = vrot.slane %v167, %v170
    %vm172 = vcmp.lt.s32.totalorder %v135, %v164
    %vm173 = vcmp.lt.s32.totalorder %v135, %v171
    %175 = vrot.lane.b32.xlu0 %v132, 96
    %v176 = vpop.permute.xlu0 %175
    %vm177 = vcmask 64512
    %v179 = vsel %vm177, %v132, 0
    %v182 = vsel %vm177, %v176, 0
    %184 = vmatprep.subr.bf16.mxu0 0
    %185 = vmatpush1.bf16.xpose.msra.mxu0 %v182
    %186 = vmatprep.subr.bf16.mxu0 0
    %187 = vmatpush1.bf16.xpose.msra.mxu0 0
    %188 = vmatprep.subr.bf16.mxu0 0
    %189 = vmatpush1.bf16.xpose.msra.mxu0 0
    %190 = vmatprep.subr.bf16.mxu0 0
    %191 = vmatpush1.bf16.xpose.msra.mxu0 0
    %192 = vmatprep.subr.bf16.mxu0 0
    %193 = vmatpush1.bf16.xpose.msra.mxu0 0
    %194 = vmatprep.subr.bf16.mxu0 0
    %195 = vmatpush1.bf16.xpose.msra.mxu0 0
    %196 = vmatprep.subr.bf16.mxu0 0
    %197 = vmatpush1.bf16.xpose.msra.mxu0 0
    %198 = vmatprep.subr.bf16.mxu0 0
    %199 = vmatpush1.bf16.xpose.msra.mxu0 0
    %200 = vmatprep.subr.bf16.mxu0 0
    %201 = vmatpush1.bf16.xpose.msra.mxu0 0
    %202 = vmatprep.subr.bf16.mxu0 0
    %203 = vmatpush1.bf16.xpose.msra.mxu0 0
    %204 = vmatprep.subr.bf16.mxu0 0
    %205 = vmatpush1.bf16.xpose.msra.mxu0 0
    %206 = vmatprep.subr.bf16.mxu0 0
    %207 = vmatpush1.bf16.xpose.msra.mxu0 0
    %208 = vmatprep.subr.bf16.mxu0 0
    %209 = vmatpush1.bf16.xpose.msra.mxu0 0
    %210 = vmatprep.subr.bf16.mxu0 0
    %211 = vmatpush1.bf16.xpose.msra.mxu0 0
    %212 = vmatprep.subr.bf16.mxu0 0
    %213 = vmatpush1.bf16.xpose.msra.mxu0 0
    %214 = vmatprep.subr.bf16.mxu0 0
    %215 = vmatpush1.bf16.xpose.msra.mxu0 0
    %216 = vmatprep.mubr.bf16.mxu0 0
    %217 = vmatmul.mubr.bf16.gmra.mrb[0].mxu0 %v179
    %v218 = vpop.f32.mrb[0].mxu0
    %v219 = vadd.f32 0.0, %v218
    %v220 = vpop.f32.mrb[0].mxu0
    %v221 = vpop.f32.mrb[0].mxu0
    %v222 = vpop.f32.mrb[0].mxu0
    %223 = vdwg.mxu0
    %225 = vrot.lane.b32.xlu0 %v133, 96
    %v226 = vpop.permute.xlu0 %225
    %v228 = vsel %vm177, %v133, 0
    %v231 = vsel %vm177, %v226, 0
    %233 = vmatprep.subr.bf16.mxu0 0
    %234 = vmatpush1.bf16.xpose.msra.mxu0 %v231
    %235 = vmatprep.subr.bf16.mxu0 0
    %236 = vmatpush1.bf16.xpose.msra.mxu0 0
    %237 = vmatprep.subr.bf16.mxu0 0
    %238 = vmatpush1.bf16.xpose.msra.mxu0 0
    %239 = vmatprep.subr.bf16.mxu0 0
    %240 = vmatpush1.bf16.xpose.msra.mxu0 0
    %241 = vmatprep.subr.bf16.mxu0 0
    %242 = vmatpush1.bf16.xpose.msra.mxu0 0
    %243 = vmatprep.subr.bf16.mxu0 0
    %244 = vmatpush1.bf16.xpose.msra.mxu0 0
    %245 = vmatprep.subr.bf16.mxu0 0
    %246 = vmatpush1.bf16.xpose.msra.mxu0 0
    %247 = vmatprep.subr.bf16.mxu0 0
    %248 = vmatpush1.bf16.xpose.msra.mxu0 0
    %249 = vmatprep.subr.bf16.mxu0 0
    %250 = vmatpush1.bf16.xpose.msra.mxu0 0
    %251 = vmatprep.subr.bf16.mxu0 0
    %252 = vmatpush1.bf16.xpose.msra.mxu0 0
    %253 = vmatprep.subr.bf16.mxu0 0
    %254 = vmatpush1.bf16.xpose.msra.mxu0 0
    %255 = vmatprep.subr.bf16.mxu0 0
    %256 = vmatpush1.bf16.xpose.msra.mxu0 0
    %257 = vmatprep.subr.bf16.mxu0 0
    %258 = vmatpush1.bf16.xpose.msra.mxu0 0
    %259 = vmatprep.subr.bf16.mxu0 0
    %260 = vmatpush1.bf16.xpose.msra.mxu0 0
    %261 = vmatprep.subr.bf16.mxu0 0
    %262 = vmatpush1.bf16.xpose.msra.mxu0 0
    %263 = vmatprep.subr.bf16.mxu0 0
    %264 = vmatpush1.bf16.xpose.msra.mxu0 0
    %265 = vmatprep.mubr.bf16.mxu0 0
    %266 = vmatmul.mubr.bf16.gmra.mrb[0].mxu0 %v228
    %v267 = vpop.f32.mrb[0].mxu0
    %v268 = vadd.f32 0.0, %v267
    %v269 = vpop.f32.mrb[0].mxu0
    %v270 = vpop.f32.mrb[0].mxu0
    %v271 = vpop.f32.mrb[0].mxu0
    %272 = vdwg.mxu0
    %v273 = vsel %vm172, 1, 0
    %v274 = vsel %vm173, 1, 0
    %vm275 = vcmp.eq.s32.totalorder %v273, 1
    %vm276 = vcmp.eq.s32.totalorder %v274, 1
    %v277 = vsel %vm275, %v219, -1e+30
    %v278 = vsel %vm276, %v268, -1e+30
    %v279 = vsel %vm177, %v277, -inf
    %280 = vmax.xlane.f32.xlu0 %v279
    %v281 = vpop.xlane.xlu0 %280
    %v282 = vsel %vm177, %v278, -inf
    %283 = vmax.xlane.f32.xlu0 %v282
    %v284 = vpop.xlane.xlu0 %283
    %v285 = vsub.f32 %v277, %v281
    %v286 = vsub.f32 %v278, %v284
    %v287 = vmul.f32 %v285, 1.442695
    %v288 = vpow.pop %v287
    %v289 = vmul.f32 %v286, 1.442695
    %v290 = vpow.pop %v289
    %v291 = vsel %vm177, %v288, 0.0
    %292 = vadd.xlane.f32.xlu0 %v291
    %v293 = vpop.xlane.xlu0 %292
    %v294 = vsel %vm177, %v290, 0.0
    %295 = vadd.xlane.f32.xlu0 %v294
    %v296 = vpop.xlane.xlu0 %295
    %v297 = vrcp.pop %v293
    %v298 = vrcp.pop %v296
    %v299 = vmul.f32 %v288, %v297
    %v300 = vmul.f32 %v290, %v298
    %v301 = vsel %vm177, %v299, 0.0
    %v302 = vrot.slane %v301, 4
    %v303 = vadd.f32 %v301, %v302
    %v304 = vrot.slane %v303, 2
    %v305 = vadd.f32 %v303, %v304
    %v306 = vrot.slane %v305, 1
    %v307 = vadd.f32 %v305, %v306
    %v308 = vsel %vm177, %v300, 0.0
    %v309 = vrot.slane %v308, 4
    %v310 = vadd.f32 %v308, %v309
    %v311 = vrot.slane %v310, 2
    %v312 = vadd.f32 %v310, %v311
    %v313 = vrot.slane %v312, 1
    %v314 = vadd.f32 %v312, %v313
    %316 = vrot.lane.b32.xlu0 %v126, 64
    %v317 = vpop.permute.xlu0 %316
    %v320 = vsel %vm177, %v307, 0
    %322 = vmatprep.subr.mxu0 0.0
    %323 = vmatpush1.msra.mxu0 %v317
    %324 = vmatprep.subr.mxu0 0.0
    %325 = vmatpush1.msra.mxu0 0.0
    %326 = vmatprep.subr.mxu0 0.0
    %327 = vmatpush1.msra.mxu0 0.0
    %328 = vmatprep.subr.mxu0 0.0
    %329 = vmatpush1.msra.mxu0 0.0
    %330 = vmatprep.subr.mxu0 0.0
    %331 = vmatpush1.msra.mxu0 0.0
    %332 = vmatprep.subr.mxu0 0.0
    %333 = vmatpush1.msra.mxu0 0.0
    %334 = vmatprep.subr.mxu0 0.0
    %335 = vmatpush1.msra.mxu0 0.0
    %336 = vmatprep.subr.mxu0 0.0
    %337 = vmatpush1.msra.mxu0 0.0
    %338 = vmatprep.subr.mxu0 0.0
    %339 = vmatpush1.msra.mxu0 0.0
    %340 = vmatprep.subr.mxu0 0.0
    %341 = vmatpush1.msra.mxu0 0.0
    %342 = vmatprep.subr.mxu0 0.0
    %343 = vmatpush1.msra.mxu0 0.0
    %344 = vmatprep.subr.mxu0 0.0
    %345 = vmatpush1.msra.mxu0 0.0
    %346 = vmatprep.subr.mxu0 0.0
    %347 = vmatpush1.msra.mxu0 0.0
    %348 = vmatprep.subr.mxu0 0.0
    %349 = vmatpush1.msra.mxu0 0.0
    %350 = vmatprep.subr.mxu0 0.0
    %351 = vmatpush1.msra.mxu0 0.0
    %352 = vmatprep.subr.mxu0 0.0
    %353 = vmatpush1.msra.mxu0 0.0
    %354 = vmatprep.subr.mxu0 0.0
    %355 = vmatpush1.msra.mxu0 0.0
    %356 = vmatprep.subr.mxu0 0.0
    %357 = vmatpush1.msra.mxu0 0.0
    %358 = vmatprep.subr.mxu0 0.0
    %359 = vmatpush1.msra.mxu0 0.0
    %360 = vmatprep.subr.mxu0 0.0
    %361 = vmatpush1.msra.mxu0 0.0
    %362 = vmatprep.subr.mxu0 0.0
    %363 = vmatpush1.msra.mxu0 0.0
    %364 = vmatprep.subr.mxu0 0.0
    %365 = vmatpush1.msra.mxu0 0.0
    %366 = vmatprep.subr.mxu0 0.0
    %367 = vmatpush1.msra.mxu0 0.0
    %368 = vmatprep.subr.mxu0 0.0
    %369 = vmatpush1.msra.mxu0 0.0
    %370 = vmatprep.subr.mxu0 0.0
    %371 = vmatpush1.msra.mxu0 0.0
    %372 = vmatprep.subr.mxu0 0.0
    %373 = vmatpush1.msra.mxu0 0.0
    %374 = vmatprep.subr.mxu0 0.0
    %375 = vmatpush1.msra.mxu0 0.0
    %376 = vmatprep.subr.mxu0 0.0
    %377 = vmatpush1.msra.mxu0 0.0
    %378 = vmatprep.subr.mxu0 0.0
    %379 = vmatpush1.msra.mxu0 0.0
    %380 = vmatprep.subr.mxu0 0.0
    %381 = vmatpush1.msra.mxu0 0.0
    %382 = vmatprep.subr.mxu0 0.0
    %383 = vmatpush1.msra.mxu0 0.0
    %384 = vmatprep.subr.mxu0 0.0
    %385 = vmatpush1.msra.mxu0 0.0
    %386 = vmatprep.mubr.f32.mxu0 0.0
    %387 = vmatmul.mubr.f32.gmra.mrb[0].mxu0 %v320
    %v388 = vpop.f32.mrb[0].mxu0
    %v389 = vadd.f32 0.0, %v388
    %v390 = vpop.f32.mrb[0].mxu0
    %391 = vdwg.mxu0
    %393 = vrot.lane.b32.xlu0 %v129, 64
    %v394 = vpop.permute.xlu0 %393
    %v397 = vsel %vm177, %v314, 0
    %399 = vmatprep.subr.mxu0 0.0
    %400 = vmatpush1.msra.mxu0 %v394
    %401 = vmatprep.subr.mxu0 0.0
    %402 = vmatpush1.msra.mxu0 0.0
    %403 = vmatprep.subr.mxu0 0.0
    %404 = vmatpush1.msra.mxu0 0.0
    %405 = vmatprep.subr.mxu0 0.0
    %406 = vmatpush1.msra.mxu0 0.0
    %407 = vmatprep.subr.mxu0 0.0
    %408 = vmatpush1.msra.mxu0 0.0
    %409 = vmatprep.subr.mxu0 0.0
    %410 = vmatpush1.msra.mxu0 0.0
    %411 = vmatprep.subr.mxu0 0.0
    %412 = vmatpush1.msra.mxu0 0.0
    %413 = vmatprep.subr.mxu0 0.0
    %414 = vmatpush1.msra.mxu0 0.0
    %415 = vmatprep.subr.mxu0 0.0
    %416 = vmatpush1.msra.mxu0 0.0
    %417 = vmatprep.subr.mxu0 0.0
    %418 = vmatpush1.msra.mxu0 0.0
    %419 = vmatprep.subr.mxu0 0.0
    %420 = vmatpush1.msra.mxu0 0.0
    %421 = vmatprep.subr.mxu0 0.0
    %422 = vmatpush1.msra.mxu0 0.0
    %423 = vmatprep.subr.mxu0 0.0
    %424 = vmatpush1.msra.mxu0 0.0
    %425 = vmatprep.subr.mxu0 0.0
    %426 = vmatpush1.msra.mxu0 0.0
    %427 = vmatprep.subr.mxu0 0.0
    %428 = vmatpush1.msra.mxu0 0.0
    %429 = vmatprep.subr.mxu0 0.0
    %430 = vmatpush1.msra.mxu0 0.0
    %431 = vmatprep.subr.mxu0 0.0
    %432 = vmatpush1.msra.mxu0 0.0
    %433 = vmatprep.subr.mxu0 0.0
    %434 = vmatpush1.msra.mxu0 0.0
    %435 = vmatprep.subr.mxu0 0.0
    %436 = vmatpush1.msra.mxu0 0.0
    %437 = vmatprep.subr.mxu0 0.0
    %438 = vmatpush1.msra.mxu0 0.0
    %439 = vmatprep.subr.mxu0 0.0
    %440 = vmatpush1.msra.mxu0 0.0
    %441 = vmatprep.subr.mxu0 0.0
    %442 = vmatpush1.msra.mxu0 0.0
    %443 = vmatprep.subr.mxu0 0.0
    %444 = vmatpush1.msra.mxu0 0.0
    %445 = vmatprep.subr.mxu0 0.0
    %446 = vmatpush1.msra.mxu0 0.0
    %447 = vmatprep.subr.mxu0 0.0
    %448 = vmatpush1.msra.mxu0 0.0
    %449 = vmatprep.subr.mxu0 0.0
    %450 = vmatpush1.msra.mxu0 0.0
    %451 = vmatprep.subr.mxu0 0.0
    %452 = vmatpush1.msra.mxu0 0.0
    %453 = vmatprep.subr.mxu0 0.0
    %454 = vmatpush1.msra.mxu0 0.0
    %455 = vmatprep.subr.mxu0 0.0
    %456 = vmatpush1.msra.mxu0 0.0
    %457 = vmatprep.subr.mxu0 0.0
    %458 = vmatpush1.msra.mxu0 0.0
    %459 = vmatprep.subr.mxu0 0.0
    %460 = vmatpush1.msra.mxu0 0.0
    %461 = vmatprep.subr.mxu0 0.0
    %462 = vmatpush1.msra.mxu0 0.0
    %463 = vmatprep.mubr.f32.mxu0 0.0
    %464 = vmatmul.mubr.f32.gmra.mrb[0].mxu0 %v397
    %v465 = vpop.f32.mrb[0].mxu0
    %v466 = vadd.f32 0.0, %v465
    %v467 = vpop.f32.mrb[0].mxu0
    %468 = vdwg.mxu0
    %469 = vrot.lane.b32.xlu0 %v132, 120
    %v470 = vpop.permute.xlu0 %469
    %471 = vrot.lane.b32.xlu0 %v132, 88
    %v472 = vpop.permute.xlu0 %471
    %v474 = vsel %vm177, %v470, 0
    %v477 = vsel %vm177, %v472, 0
    %479 = vmatprep.subr.bf16.mxu0 0
    %480 = vmatpush1.bf16.xpose.msra.mxu0 %v477
    %481 = vmatprep.subr.bf16.mxu0 0
    %482 = vmatpush1.bf16.xpose.msra.mxu0 0
    %483 = vmatprep.subr.bf16.mxu0 0
    %484 = vmatpush1.bf16.xpose.msra.mxu0 0
    %485 = vmatprep.subr.bf16.mxu0 0
    %486 = vmatpush1.bf16.xpose.msra.mxu0 0
    %487 = vmatprep.subr.bf16.mxu0 0
    %488 = vmatpush1.bf16.xpose.msra.mxu0 0
    %489 = vmatprep.subr.bf16.mxu0 0
    %490 = vmatpush1.bf16.xpose.msra.mxu0 0
    %491 = vmatprep.subr.bf16.mxu0 0
    %492 = vmatpush1.bf16.xpose.msra.mxu0 0
    %493 = vmatprep.subr.bf16.mxu0 0
    %494 = vmatpush1.bf16.xpose.msra.mxu0 0
    %495 = vmatprep.subr.bf16.mxu0 0
    %496 = vmatpush1.bf16.xpose.msra.mxu0 0
    %497 = vmatprep.subr.bf16.mxu0 0
    %498 = vmatpush1.bf16.xpose.msra.mxu0 0
    %499 = vmatprep.subr.bf16.mxu0 0
    %500 = vmatpush1.bf16.xpose.msra.mxu0 0
    %501 = vmatprep.subr.bf16.mxu0 0
    %502 = vmatpush1.bf16.xpose.msra.mxu0 0
    %503 = vmatprep.subr.bf16.mxu0 0
    %504 = vmatpush1.bf16.xpose.msra.mxu0 0
    %505 = vmatprep.subr.bf16.mxu0 0
    %506 = vmatpush1.bf16.xpose.msra.mxu0 0
    %507 = vmatprep.subr.bf16.mxu0 0
    %508 = vmatpush1.bf16.xpose.msra.mxu0 0
    %509 = vmatprep.subr.bf16.mxu0 0
    %510 = vmatpush1.bf16.xpose.msra.mxu0 0
    %511 = vmatprep.mubr.bf16.mxu0 0
    %512 = vmatmul.mubr.bf16.gmra.mrb[0].mxu0 %v474
    %v513 = vpop.f32.mrb[0].mxu0
    %v514 = vadd.f32 0.0, %v513
    %v515 = vpop.f32.mrb[0].mxu0
    %v516 = vpop.f32.mrb[0].mxu0
    %v517 = vpop.f32.mrb[0].mxu0
    %518 = vdwg.mxu0
    %519 = vrot.lane.b32.xlu0 %v133, 120
    %v520 = vpop.permute.xlu0 %519
    %521 = vrot.lane.b32.xlu0 %v133, 88
    %v522 = vpop.permute.xlu0 %521
    %v524 = vsel %vm177, %v520, 0
    %v527 = vsel %vm177, %v522, 0
    %529 = vmatprep.subr.bf16.mxu0 0
    %530 = vmatpush1.bf16.xpose.msra.mxu0 %v527
    %531 = vmatprep.subr.bf16.mxu0 0
    %532 = vmatpush1.bf16.xpose.msra.mxu0 0
    %533 = vmatprep.subr.bf16.mxu0 0
    %534 = vmatpush1.bf16.xpose.msra.mxu0 0
    %535 = vmatprep.subr.bf16.mxu0 0
    %536 = vmatpush1.bf16.xpose.msra.mxu0 0
    %537 = vmatprep.subr.bf16.mxu0 0
    %538 = vmatpush1.bf16.xpose.msra.mxu0 0
    %539 = vmatprep.subr.bf16.mxu0 0
    %540 = vmatpush1.bf16.xpose.msra.mxu0 0
    %541 = vmatprep.subr.bf16.mxu0 0
    %542 = vmatpush1.bf16.xpose.msra.mxu0 0
    %543 = vmatprep.subr.bf16.mxu0 0
    %544 = vmatpush1.bf16.xpose.msra.mxu0 0
    %545 = vmatprep.subr.bf16.mxu0 0
    %546 = vmatpush1.bf16.xpose.msra.mxu0 0
    %547 = vmatprep.subr.bf16.mxu0 0
    %548 = vmatpush1.bf16.xpose.msra.mxu0 0
    %549 = vmatprep.subr.bf16.mxu0 0
    %550 = vmatpush1.bf16.xpose.msra.mxu0 0
    %551 = vmatprep.subr.bf16.mxu0 0
    %552 = vmatpush1.bf16.xpose.msra.mxu0 0
    %553 = vmatprep.subr.bf16.mxu0 0
    %554 = vmatpush1.bf16.xpose.msra.mxu0 0
    %555 = vmatprep.subr.bf16.mxu0 0
    %556 = vmatpush1.bf16.xpose.msra.mxu0 0
    %557 = vmatprep.subr.bf16.mxu0 0
    %558 = vmatpush1.bf16.xpose.msra.mxu0 0
    %559 = vmatprep.subr.bf16.mxu0 0
    %560 = vmatpush1.bf16.xpose.msra.mxu0 0
    %561 = vmatprep.mubr.bf16.mxu0 0
    %562 = vmatmul.mubr.bf16.gmra.mrb[0].mxu0 %v524
    %v563 = vpop.f32.mrb[0].mxu0
    %v564 = vadd.f32 0.0, %v563
    %v565 = vpop.f32.mrb[0].mxu0
    %v566 = vpop.f32.mrb[0].mxu0
    %v567 = vpop.f32.mrb[0].mxu0
    %568 = vdwg.mxu0
    %v569 = vsel %vm275, %v514, -1e+30
    %v570 = vsel %vm276, %v564, -1e+30
    %v571 = vsel %vm177, %v569, -inf
    %572 = vmax.xlane.f32.xlu0 %v571
    %v573 = vpop.xlane.xlu0 %572
    %v574 = vsel %vm177, %v570, -inf
    %575 = vmax.xlane.f32.xlu0 %v574
    %v576 = vpop.xlane.xlu0 %575
    %v577 = vsub.f32 %v569, %v573
    %v578 = vsub.f32 %v570, %v576
    %v579 = vmul.f32 %v577, 1.442695
    %v580 = vpow.pop %v579
    %v581 = vmul.f32 %v578, 1.442695
    %v582 = vpow.pop %v581
    %v583 = vsel %vm177, %v580, 0.0
    %584 = vadd.xlane.f32.xlu0 %v583
    %v585 = vpop.xlane.xlu0 %584
    %v586 = vsel %vm177, %v582, 0.0
    %587 = vadd.xlane.f32.xlu0 %v586
    %v588 = vpop.xlane.xlu0 %587
    %v589 = vrcp.pop %v585
    %v590 = vrcp.pop %v588
    %v591 = vmul.f32 %v580, %v589
    %v592 = vmul.f32 %v582, %v590
    %v593 = vadd.f32 %v299, %v591
    %v594 = vadd.f32 %v300, %v592
    %v595 = vsel %vm177, %v591, 0.0
    %v596 = vrot.slane %v595, 4
    %v597 = vadd.f32 %v595, %v596
    %v598 = vrot.slane %v597, 2
    %v599 = vadd.f32 %v597, %v598
    %v600 = vrot.slane %v599, 1
    %v601 = vadd.f32 %v599, %v600
    %v602 = vsel %vm177, %v592, 0.0
    %v603 = vrot.slane %v602, 4
    %v604 = vadd.f32 %v602, %v603
    %v605 = vrot.slane %v604, 2
    %v606 = vadd.f32 %v604, %v605
    %v607 = vrot.slane %v606, 1
    %v608 = vadd.f32 %v606, %v607
    %609 = vrot.lane.b32.xlu0 %v126, 56
    %v610 = vpop.permute.xlu0 %609
    %v613 = vsel %vm177, %v601, 0
    %615 = vmatprep.subr.mxu0 0.0
    %616 = vmatpush1.msra.mxu0 %v610
    %617 = vmatprep.subr.mxu0 0.0
    %618 = vmatpush1.msra.mxu0 0.0
    %619 = vmatprep.subr.mxu0 0.0
    %620 = vmatpush1.msra.mxu0 0.0
    %621 = vmatprep.subr.mxu0 0.0
    %622 = vmatpush1.msra.mxu0 0.0
    %623 = vmatprep.subr.mxu0 0.0
    %624 = vmatpush1.msra.mxu0 0.0
    %625 = vmatprep.subr.mxu0 0.0
    %626 = vmatpush1.msra.mxu0 0.0
    %627 = vmatprep.subr.mxu0 0.0
    %628 = vmatpush1.msra.mxu0 0.0
    %629 = vmatprep.subr.mxu0 0.0
    %630 = vmatpush1.msra.mxu0 0.0
    %631 = vmatprep.subr.mxu0 0.0
    %632 = vmatpush1.msra.mxu0 0.0
    %633 = vmatprep.subr.mxu0 0.0
    %634 = vmatpush1.msra.mxu0 0.0
    %635 = vmatprep.subr.mxu0 0.0
    %636 = vmatpush1.msra.mxu0 0.0
    %637 = vmatprep.subr.mxu0 0.0
    %638 = vmatpush1.msra.mxu0 0.0
    %639 = vmatprep.subr.mxu0 0.0
    %640 = vmatpush1.msra.mxu0 0.0
    %641 = vmatprep.subr.mxu0 0.0
    %642 = vmatpush1.msra.mxu0 0.0
    %643 = vmatprep.subr.mxu0 0.0
    %644 = vmatpush1.msra.mxu0 0.0
    %645 = vmatprep.subr.mxu0 0.0
    %646 = vmatpush1.msra.mxu0 0.0
    %647 = vmatprep.subr.mxu0 0.0
    %648 = vmatpush1.msra.mxu0 0.0
    %649 = vmatprep.subr.mxu0 0.0
    %650 = vmatpush1.msra.mxu0 0.0
    %651 = vmatprep.subr.mxu0 0.0
    %652 = vmatpush1.msra.mxu0 0.0
    %653 = vmatprep.subr.mxu0 0.0
    %654 = vmatpush1.msra.mxu0 0.0
    %655 = vmatprep.subr.mxu0 0.0
    %656 = vmatpush1.msra.mxu0 0.0
    %657 = vmatprep.subr.mxu0 0.0
    %658 = vmatpush1.msra.mxu0 0.0
    %659 = vmatprep.subr.mxu0 0.0
    %660 = vmatpush1.msra.mxu0 0.0
    %661 = vmatprep.subr.mxu0 0.0
    %662 = vmatpush1.msra.mxu0 0.0
    %663 = vmatprep.subr.mxu0 0.0
    %664 = vmatpush1.msra.mxu0 0.0
    %665 = vmatprep.subr.mxu0 0.0
    %666 = vmatpush1.msra.mxu0 0.0
    %667 = vmatprep.subr.mxu0 0.0
    %668 = vmatpush1.msra.mxu0 0.0
    %669 = vmatprep.subr.mxu0 0.0
    %670 = vmatpush1.msra.mxu0 0.0
    %671 = vmatprep.subr.mxu0 0.0
    %672 = vmatpush1.msra.mxu0 0.0
    %673 = vmatprep.subr.mxu0 0.0
    %674 = vmatpush1.msra.mxu0 0.0
    %675 = vmatprep.subr.mxu0 0.0
    %676 = vmatpush1.msra.mxu0 0.0
    %677 = vmatprep.subr.mxu0 0.0
    %678 = vmatpush1.msra.mxu0 0.0
    %679 = vmatprep.mubr.f32.mxu0 0.0
    %680 = vmatmul.mubr.f32.gmra.mrb[0].mxu0 %v613
    %v681 = vpop.f32.mrb[0].mxu0
    %v682 = vadd.f32 0.0, %v681
    %v683 = vpop.f32.mrb[0].mxu0
    %684 = vdwg.mxu0
    %685 = vrot.lane.b32.xlu0 %v129, 56
    %v686 = vpop.permute.xlu0 %685
    %v689 = vsel %vm177, %v608, 0
    %691 = vmatprep.subr.mxu0 0.0
    %692 = vmatpush1.msra.mxu0 %v686
    %693 = vmatprep.subr.mxu0 0.0
    %694 = vmatpush1.msra.mxu0 0.0
    %695 = vmatprep.subr.mxu0 0.0
    %696 = vmatpush1.msra.mxu0 0.0
    %697 = vmatprep.subr.mxu0 0.0
    %698 = vmatpush1.msra.mxu0 0.0
    %699 = vmatprep.subr.mxu0 0.0
    %700 = vmatpush1.msra.mxu0 0.0
    %701 = vmatprep.subr.mxu0 0.0
    %702 = vmatpush1.msra.mxu0 0.0
    %703 = vmatprep.subr.mxu0 0.0
    %704 = vmatpush1.msra.mxu0 0.0
    %705 = vmatprep.subr.mxu0 0.0
    %706 = vmatpush1.msra.mxu0 0.0
    %707 = vmatprep.subr.mxu0 0.0
    %708 = vmatpush1.msra.mxu0 0.0
    %709 = vmatprep.subr.mxu0 0.0
    %710 = vmatpush1.msra.mxu0 0.0
    %711 = vmatprep.subr.mxu0 0.0
    %712 = vmatpush1.msra.mxu0 0.0
    %713 = vmatprep.subr.mxu0 0.0
    %714 = vmatpush1.msra.mxu0 0.0
    %715 = vmatprep.subr.mxu0 0.0
    %716 = vmatpush1.msra.mxu0 0.0
    %717 = vmatprep.subr.mxu0 0.0
    %718 = vmatpush1.msra.mxu0 0.0
    %719 = vmatprep.subr.mxu0 0.0
    %720 = vmatpush1.msra.mxu0 0.0
    %721 = vmatprep.subr.mxu0 0.0
    %722 = vmatpush1.msra.mxu0 0.0
    %723 = vmatprep.subr.mxu0 0.0
    %724 = vmatpush1.msra.mxu0 0.0
    %725 = vmatprep.subr.mxu0 0.0
    %726 = vmatpush1.msra.mxu0 0.0
    %727 = vmatprep.subr.mxu0 0.0
    %728 = vmatpush1.msra.mxu0 0.0
    %729 = vmatprep.subr.mxu0 0.0
    %730 = vmatpush1.msra.mxu0 0.0
    %731 = vmatprep.subr.mxu0 0.0
    %732 = vmatpush1.msra.mxu0 0.0
    %733 = vmatprep.subr.mxu0 0.0
    %734 = vmatpush1.msra.mxu0 0.0
    %735 = vmatprep.subr.mxu0 0.0
    %736 = vmatpush1.msra.mxu0 0.0
    %737 = vmatprep.subr.mxu0 0.0
    %738 = vmatpush1.msra.mxu0 0.0
    %739 = vmatprep.subr.mxu0 0.0
    %740 = vmatpush1.msra.mxu0 0.0
    %741 = vmatprep.subr.mxu0 0.0
    %742 = vmatpush1.msra.mxu0 0.0
    %743 = vmatprep.subr.mxu0 0.0
    %744 = vmatpush1.msra.mxu0 0.0
    %745 = vmatprep.subr.mxu0 0.0
    %746 = vmatpush1.msra.mxu0 0.0
    %747 = vmatprep.subr.mxu0 0.0
    %748 = vmatpush1.msra.mxu0 0.0
    %749 = vmatprep.subr.mxu0 0.0
    %750 = vmatpush1.msra.mxu0 0.0
    %751 = vmatprep.subr.mxu0 0.0
    %752 = vmatpush1.msra.mxu0 0.0
    %753 = vmatprep.subr.mxu0 0.0
    %754 = vmatpush1.msra.mxu0 0.0
    %755 = vmatprep.mubr.f32.mxu0 0.0
    %756 = vmatmul.mubr.f32.gmra.mrb[0].mxu0 %v689
    %v757 = vpop.f32.mrb[0].mxu0
    %v758 = vadd.f32 0.0, %v757
    %v759 = vpop.f32.mrb[0].mxu0
    %760 = vdwg.mxu0
    %761 = vrot.lane.b32.xlu0 %v132, 112
    %v762 = vpop.permute.xlu0 %761
    %763 = vrot.lane.b32.xlu0 %v132, 80
    %v764 = vpop.permute.xlu0 %763
    %v766 = vsel %vm177, %v762, 0
    %v769 = vsel %vm177, %v764, 0
    %771 = vmatprep.subr.bf16.mxu0 0
    %772 = vmatpush1.bf16.xpose.msra.mxu0 %v769
    %773 = vmatprep.subr.bf16.mxu0 0
    %774 = vmatpush1.bf16.xpose.msra.mxu0 0
    %775 = vmatprep.subr.bf16.mxu0 0
    %776 = vmatpush1.bf16.xpose.msra.mxu0 0
    %777 = vmatprep.subr.bf16.mxu0 0
    %778 = vmatpush1.bf16.xpose.msra.mxu0 0
    %779 = vmatprep.subr.bf16.mxu0 0
    %780 = vmatpush1.bf16.xpose.msra.mxu0 0
    %781 = vmatprep.subr.bf16.mxu0 0
    %782 = vmatpush1.bf16.xpose.msra.mxu0 0
    %783 = vmatprep.subr.bf16.mxu0 0
    %784 = vmatpush1.bf16.xpose.msra.mxu0 0
    %785 = vmatprep.subr.bf16.mxu0 0
    %786 = vmatpush1.bf16.xpose.msra.mxu0 0
    %787 = vmatprep.subr.bf16.mxu0 0
    %788 = vmatpush1.bf16.xpose.msra.mxu0 0
    %789 = vmatprep.subr.bf16.mxu0 0
    %790 = vmatpush1.bf16.xpose.msra.mxu0 0
    %791 = vmatprep.subr.bf16.mxu0 0
    %792 = vmatpush1.bf16.xpose.msra.mxu0 0
    %793 = vmatprep.subr.bf16.mxu0 0
    %794 = vmatpush1.bf16.xpose.msra.mxu0 0
    %795 = vmatprep.subr.bf16.mxu0 0
    %796 = vmatpush1.bf16.xpose.msra.mxu0 0
    %797 = vmatprep.subr.bf16.mxu0 0
    %798 = vmatpush1.bf16.xpose.msra.mxu0 0
    %799 = vmatprep.subr.bf16.mxu0 0
    %800 = vmatpush1.bf16.xpose.msra.mxu0 0
    %801 = vmatprep.subr.bf16.mxu0 0
    %802 = vmatpush1.bf16.xpose.msra.mxu0 0
    %803 = vmatprep.mubr.bf16.mxu0 0
    %804 = vmatmul.mubr.bf16.gmra.mrb[0].mxu0 %v766
    %v805 = vpop.f32.mrb[0].mxu0
    %v806 = vadd.f32 0.0, %v805
    %v807 = vpop.f32.mrb[0].mxu0
    %v808 = vpop.f32.mrb[0].mxu0
    %v809 = vpop.f32.mrb[0].mxu0
    %810 = vdwg.mxu0
    %811 = vrot.lane.b32.xlu0 %v133, 112
    %v812 = vpop.permute.xlu0 %811
    %813 = vrot.lane.b32.xlu0 %v133, 80
    %v814 = vpop.permute.xlu0 %813
    %v816 = vsel %vm177, %v812, 0
    %v819 = vsel %vm177, %v814, 0
    %821 = vmatprep.subr.bf16.mxu0 0
    %822 = vmatpush1.bf16.xpose.msra.mxu0 %v819
    %823 = vmatprep.subr.bf16.mxu0 0
    %824 = vmatpush1.bf16.xpose.msra.mxu0 0
    %825 = vmatprep.subr.bf16.mxu0 0
    %826 = vmatpush1.bf16.xpose.msra.mxu0 0
    %827 = vmatprep.subr.bf16.mxu0 0
    %828 = vmatpush1.bf16.xpose.msra.mxu0 0
    %829 = vmatprep.subr.bf16.mxu0 0
    %830 = vmatpush1.bf16.xpose.msra.mxu0 0
    %831 = vmatprep.subr.bf16.mxu0 0
    %832 = vmatpush1.bf16.xpose.msra.mxu0 0
    %833 = vmatprep.subr.bf16.mxu0 0
    %834 = vmatpush1.bf16.xpose.msra.mxu0 0
    %835 = vmatprep.subr.bf16.mxu0 0
    %836 = vmatpush1.bf16.xpose.msra.mxu0 0
    %837 = vmatprep.subr.bf16.mxu0 0
    %838 = vmatpush1.bf16.xpose.msra.mxu0 0
    %839 = vmatprep.subr.bf16.mxu0 0
    %840 = vmatpush1.bf16.xpose.msra.mxu0 0
    %841 = vmatprep.subr.bf16.mxu0 0
    %842 = vmatpush1.bf16.xpose.msra.mxu0 0
    %843 = vmatprep.subr.bf16.mxu0 0
    %844 = vmatpush1.bf16.xpose.msra.mxu0 0
    %845 = vmatprep.subr.bf16.mxu0 0
    %846 = vmatpush1.bf16.xpose.msra.mxu0 0
    %847 = vmatprep.subr.bf16.mxu0 0
    %848 = vmatpush1.bf16.xpose.msra.mxu0 0
    %849 = vmatprep.subr.bf16.mxu0 0
    %850 = vmatpush1.bf16.xpose.msra.mxu0 0
    %851 = vmatprep.subr.bf16.mxu0 0
    %852 = vmatpush1.bf16.xpose.msra.mxu0 0
    %853 = vmatprep.mubr.bf16.mxu0 0
    %854 = vmatmul.mubr.bf16.gmra.mrb[0].mxu0 %v816
    %v855 = vpop.f32.mrb[0].mxu0
    %v856 = vadd.f32 0.0, %v855
    %v857 = vpop.f32.mrb[0].mxu0
    %v858 = vpop.f32.mrb[0].mxu0
    %v859 = vpop.f32.mrb[0].mxu0
    %860 = vdwg.mxu0
    %v861 = vsel %vm275, %v806, -1e+30
    %v862 = vsel %vm276, %v856, -1e+30
    %v863 = vsel %vm177, %v861, -inf
    %864 = vmax.xlane.f32.xlu0 %v863
    %v865 = vpop.xlane.xlu0 %864
    %v866 = vsel %vm177, %v862, -inf
    %867 = vmax.xlane.f32.xlu0 %v866
    %v868 = vpop.xlane.xlu0 %867
    %v869 = vsub.f32 %v861, %v865
    %v870 = vsub.f32 %v862, %v868
    %v871 = vmul.f32 %v869, 1.442695
    %v872 = vpow.pop %v871
    %v873 = vmul.f32 %v870, 1.442695
    %v874 = vpow.pop %v873
    %v875 = vsel %vm177, %v872, 0.0
    %876 = vadd.xlane.f32.xlu0 %v875
    %v877 = vpop.xlane.xlu0 %876
    %v878 = vsel %vm177, %v874, 0.0
    %879 = vadd.xlane.f32.xlu0 %v878
    %v880 = vpop.xlane.xlu0 %879
    %v881 = vrcp.pop %v877
    %v882 = vrcp.pop %v880
    %v883 = vmul.f32 %v872, %v881
    %v884 = vmul.f32 %v874, %v882
    %v885 = vadd.f32 %v593, %v883
    %v886 = vadd.f32 %v594, %v884
    %v887 = vsel %vm177, %v883, 0.0
    %v888 = vrot.slane %v887, 4
    %v889 = vadd.f32 %v887, %v888
    %v890 = vrot.slane %v889, 2
    %v891 = vadd.f32 %v889, %v890
    %v892 = vrot.slane %v891, 1
    %v893 = vadd.f32 %v891, %v892
    %v894 = vsel %vm177, %v884, 0.0
    %v895 = vrot.slane %v894, 4
    %v896 = vadd.f32 %v894, %v895
    %v897 = vrot.slane %v896, 2
    %v898 = vadd.f32 %v896, %v897
    %v899 = vrot.slane %v898, 1
    %v900 = vadd.f32 %v898, %v899
    %901 = vrot.lane.b32.xlu0 %v126, 48
    %v902 = vpop.permute.xlu0 %901
    %v905 = vsel %vm177, %v893, 0
    %907 = vmatprep.subr.mxu0 0.0
    %908 = vmatpush1.msra.mxu0 %v902
    %909 = vmatprep.subr.mxu0 0.0
    %910 = vmatpush1.msra.mxu0 0.0
    %911 = vmatprep.subr.mxu0 0.0
    %912 = vmatpush1.msra.mxu0 0.0
    %913 = vmatprep.subr.mxu0 0.0
    %914 = vmatpush1.msra.mxu0 0.0
    %915 = vmatprep.subr.mxu0 0.0
    %916 = vmatpush1.msra.mxu0 0.0
    %917 = vmatprep.subr.mxu0 0.0
    %918 = vmatpush1.msra.mxu0 0.0
    %919 = vmatprep.subr.mxu0 0.0
    %920 = vmatpush1.msra.mxu0 0.0
    %921 = vmatprep.subr.mxu0 0.0
    %922 = vmatpush1.msra.mxu0 0.0
    %923 = vmatprep.subr.mxu0 0.0
    %924 = vmatpush1.msra.mxu0 0.0
    %925 = vmatprep.subr.mxu0 0.0
    %926 = vmatpush1.msra.mxu0 0.0
    %927 = vmatprep.subr.mxu0 0.0
    %928 = vmatpush1.msra.mxu0 0.0
    %929 = vmatprep.subr.mxu0 0.0
    %930 = vmatpush1.msra.mxu0 0.0
    %931 = vmatprep.subr.mxu0 0.0
    %932 = vmatpush1.msra.mxu0 0.0
    %933 = vmatprep.subr.mxu0 0.0
    %934 = vmatpush1.msra.mxu0 0.0
    %935 = vmatprep.subr.mxu0 0.0
    %936 = vmatpush1.msra.mxu0 0.0
    %937 = vmatprep.subr.mxu0 0.0
    %938 = vmatpush1.msra.mxu0 0.0
    %939 = vmatprep.subr.mxu0 0.0
    %940 = vmatpush1.msra.mxu0 0.0
    %941 = vmatprep.subr.mxu0 0.0
    %942 = vmatpush1.msra.mxu0 0.0
    %943 = vmatprep.subr.mxu0 0.0
    %944 = vmatpush1.msra.mxu0 0.0
    %945 = vmatprep.subr.mxu0 0.0
    %946 = vmatpush1.msra.mxu0 0.0
    %947 = vmatprep.subr.mxu0 0.0
    %948 = vmatpush1.msra.mxu0 0.0
    %949 = vmatprep.subr.mxu0 0.0
    %950 = vmatpush1.msra.mxu0 0.0
    %951 = vmatprep.subr.mxu0 0.0
    %952 = vmatpush1.msra.mxu0 0.0
    %953 = vmatprep.subr.mxu0 0.0
    %954 = vmatpush1.msra.mxu0 0.0
    %955 = vmatprep.subr.mxu0 0.0
    %956 = vmatpush1.msra.mxu0 0.0
    %957 = vmatprep.subr.mxu0 0.0
    %958 = vmatpush1.msra.mxu0 0.0
    %959 = vmatprep.subr.mxu0 0.0
    %960 = vmatpush1.msra.mxu0 0.0
    %961 = vmatprep.subr.mxu0 0.0
    %962 = vmatpush1.msra.mxu0 0.0
    %963 = vmatprep.subr.mxu0 0.0
    %964 = vmatpush1.msra.mxu0 0.0
    %965 = vmatprep.subr.mxu0 0.0
    %966 = vmatpush1.msra.mxu0 0.0
    %967 = vmatprep.subr.mxu0 0.0
    %968 = vmatpush1.msra.mxu0 0.0
    %969 = vmatprep.subr.mxu0 0.0
    %970 = vmatpush1.msra.mxu0 0.0
    %971 = vmatprep.mubr.f32.mxu0 0.0
    %972 = vmatmul.mubr.f32.gmra.mrb[0].mxu0 %v905
    %v973 = vpop.f32.mrb[0].mxu0
    %v974 = vadd.f32 0.0, %v973
    %v975 = vpop.f32.mrb[0].mxu0
    %976 = vdwg.mxu0
    %977 = vrot.lane.b32.xlu0 %v129, 48
    %v978 = vpop.permute.xlu0 %977
    %v981 = vsel %vm177, %v900, 0
    %983 = vmatprep.subr.mxu0 0.0
    %984 = vmatpush1.msra.mxu0 %v978
    %985 = vmatprep.subr.mxu0 0.0
    %986 = vmatpush1.msra.mxu0 0.0
    %987 = vmatprep.subr.mxu0 0.0
    %988 = vmatpush1.msra.mxu0 0.0
    %989 = vmatprep.subr.mxu0 0.0
    %990 = vmatpush1.msra.mxu0 0.0
    %991 = vmatprep.subr.mxu0 0.0
    %992 = vmatpush1.msra.mxu0 0.0
    %993 = vmatprep.subr.mxu0 0.0
    %994 = vmatpush1.msra.mxu0 0.0
    %995 = vmatprep.subr.mxu0 0.0
    %996 = vmatpush1.msra.mxu0 0.0
    %997 = vmatprep.subr.mxu0 0.0
    %998 = vmatpush1.msra.mxu0 0.0
    %999 = vmatprep.subr.mxu0 0.0
    %1000 = vmatpush1.msra.mxu0 0.0
    %1001 = vmatprep.subr.mxu0 0.0
    %1002 = vmatpush1.msra.mxu0 0.0
    %1003 = vmatprep.subr.mxu0 0.0
    %1004 = vmatpush1.msra.mxu0 0.0
    %1005 = vmatprep.subr.mxu0 0.0
    %1006 = vmatpush1.msra.mxu0 0.0
    %1007 = vmatprep.subr.mxu0 0.0
    %1008 = vmatpush1.msra.mxu0 0.0
    %1009 = vmatprep.subr.mxu0 0.0
    %1010 = vmatpush1.msra.mxu0 0.0
    %1011 = vmatprep.subr.mxu0 0.0
    %1012 = vmatpush1.msra.mxu0 0.0
    %1013 = vmatprep.subr.mxu0 0.0
    %1014 = vmatpush1.msra.mxu0 0.0
    %1015 = vmatprep.subr.mxu0 0.0
    %1016 = vmatpush1.msra.mxu0 0.0
    %1017 = vmatprep.subr.mxu0 0.0
    %1018 = vmatpush1.msra.mxu0 0.0
    %1019 = vmatprep.subr.mxu0 0.0
    %1020 = vmatpush1.msra.mxu0 0.0
    %1021 = vmatprep.subr.mxu0 0.0
    %1022 = vmatpush1.msra.mxu0 0.0
    %1023 = vmatprep.subr.mxu0 0.0
    %1024 = vmatpush1.msra.mxu0 0.0
    %1025 = vmatprep.subr.mxu0 0.0
    %1026 = vmatpush1.msra.mxu0 0.0
    %1027 = vmatprep.subr.mxu0 0.0
    %1028 = vmatpush1.msra.mxu0 0.0
    %1029 = vmatprep.subr.mxu0 0.0
    %1030 = vmatpush1.msra.mxu0 0.0
    %1031 = vmatprep.subr.mxu0 0.0
    %1032 = vmatpush1.msra.mxu0 0.0
    %1033 = vmatprep.subr.mxu0 0.0
    %1034 = vmatpush1.msra.mxu0 0.0
    %1035 = vmatprep.subr.mxu0 0.0
    %1036 = vmatpush1.msra.mxu0 0.0
    %1037 = vmatprep.subr.mxu0 0.0
    %1038 = vmatpush1.msra.mxu0 0.0
    %1039 = vmatprep.subr.mxu0 0.0
    %1040 = vmatpush1.msra.mxu0 0.0
    %1041 = vmatprep.subr.mxu0 0.0
    %1042 = vmatpush1.msra.mxu0 0.0
    %1043 = vmatprep.subr.mxu0 0.0
    %1044 = vmatpush1.msra.mxu0 0.0
    %1045 = vmatprep.subr.mxu0 0.0
    %1046 = vmatpush1.msra.mxu0 0.0
    %1047 = vmatprep.mubr.f32.mxu0 0.0
    %1048 = vmatmul.mubr.f32.gmra.mrb[0].mxu0 %v981
    %v1049 = vpop.f32.mrb[0].mxu0
    %v1050 = vadd.f32 0.0, %v1049
    %v1051 = vpop.f32.mrb[0].mxu0
    %1052 = vdwg.mxu0
    %1053 = vrot.lane.b32.xlu0 %v132, 104
    %v1054 = vpop.permute.xlu0 %1053
    %1055 = vrot.lane.b32.xlu0 %v132, 72
    %v1056 = vpop.permute.xlu0 %1055
    %v1058 = vsel %vm177, %v1054, 0
    %v1061 = vsel %vm177, %v1056, 0
    %1063 = vmatprep.subr.bf16.mxu0 0
    %1064 = vmatpush1.bf16.xpose.msra.mxu0 %v1061
    %1065 = vmatprep.subr.bf16.mxu0 0
    %1066 = vmatpush1.bf16.xpose.msra.mxu0 0
    %1067 = vmatprep.subr.bf16.mxu0 0
    %1068 = vmatpush1.bf16.xpose.msra.mxu0 0
    %1069 = vmatprep.subr.bf16.mxu0 0
    %1070 = vmatpush1.bf16.xpose.msra.mxu0 0
    %1071 = vmatprep.subr.bf16.mxu0 0
    %1072 = vmatpush1.bf16.xpose.msra.mxu0 0
    %1073 = vmatprep.subr.bf16.mxu0 0
    %1074 = vmatpush1.bf16.xpose.msra.mxu0 0
    %1075 = vmatprep.subr.bf16.mxu0 0
    %1076 = vmatpush1.bf16.xpose.msra.mxu0 0
    %1077 = vmatprep.subr.bf16.mxu0 0
    %1078 = vmatpush1.bf16.xpose.msra.mxu0 0
    %1079 = vmatprep.subr.bf16.mxu0 0
    %1080 = vmatpush1.bf16.xpose.msra.mxu0 0
    %1081 = vmatprep.subr.bf16.mxu0 0
    %1082 = vmatpush1.bf16.xpose.msra.mxu0 0
    %1083 = vmatprep.subr.bf16.mxu0 0
    %1084 = vmatpush1.bf16.xpose.msra.mxu0 0
    %1085 = vmatprep.subr.bf16.mxu0 0
    %1086 = vmatpush1.bf16.xpose.msra.mxu0 0
    %1087 = vmatprep.subr.bf16.mxu0 0
    %1088 = vmatpush1.bf16.xpose.msra.mxu0 0
    %1089 = vmatprep.subr.bf16.mxu0 0
    %1090 = vmatpush1.bf16.xpose.msra.mxu0 0
    %1091 = vmatprep.subr.bf16.mxu0 0
    %1092 = vmatpush1.bf16.xpose.msra.mxu0 0
    %1093 = vmatprep.subr.bf16.mxu0 0
    %1094 = vmatpush1.bf16.xpose.msra.mxu0 0
    %1095 = vmatprep.mubr.bf16.mxu0 0
    %1096 = vmatmul.mubr.bf16.gmra.mrb[0].mxu0 %v1058
    %v1097 = vpop.f32.mrb[0].mxu0
    %v1098 = vadd.f32 0.0, %v1097
    %v1099 = vpop.f32.mrb[0].mxu0
    %v1100 = vpop.f32.mrb[0].mxu0
    %v1101 = vpop.f32.mrb[0].mxu0
    %1102 = vdwg.mxu0
    %1103 = vrot.lane.b32.xlu0 %v133, 104
    %v1104 = vpop.permute.xlu0 %1103
    %1105 = vrot.lane.b32.xlu0 %v133, 72
    %v1106 = vpop.permute.xlu0 %1105
    %v1108 = vsel %vm177, %v1104, 0
    %v1111 = vsel %vm177, %v1106, 0
    %1113 = vmatprep.subr.bf16.mxu0 0
    %1114 = vmatpush1.bf16.xpose.msra.mxu0 %v1111
    %1115 = vmatprep.subr.bf16.mxu0 0
    %1116 = vmatpush1.bf16.xpose.msra.mxu0 0
    %1117 = vmatprep.subr.bf16.mxu0 0
    %1118 = vmatpush1.bf16.xpose.msra.mxu0 0
    %1119 = vmatprep.subr.bf16.mxu0 0
    %1120 = vmatpush1.bf16.xpose.msra.mxu0 0
    %1121 = vmatprep.subr.bf16.mxu0 0
    %1122 = vmatpush1.bf16.xpose.msra.mxu0 0
    %1123 = vmatprep.subr.bf16.mxu0 0
    %1124 = vmatpush1.bf16.xpose.msra.mxu0 0
    %1125 = vmatprep.subr.bf16.mxu0 0
    %1126 = vmatpush1.bf16.xpose.msra.mxu0 0
    %1127 = vmatprep.subr.bf16.mxu0 0
    %1128 = vmatpush1.bf16.xpose.msra.mxu0 0
    %1129 = vmatprep.subr.bf16.mxu0 0
    %1130 = vmatpush1.bf16.xpose.msra.mxu0 0
    %1131 = vmatprep.subr.bf16.mxu0 0
    %1132 = vmatpush1.bf16.xpose.msra.mxu0 0
    %1133 = vmatprep.subr.bf16.mxu0 0
    %1134 = vmatpush1.bf16.xpose.msra.mxu0 0
    %1135 = vmatprep.subr.bf16.mxu0 0
    %1136 = vmatpush1.bf16.xpose.msra.mxu0 0
    %1137 = vmatprep.subr.bf16.mxu0 0
    %1138 = vmatpush1.bf16.xpose.msra.mxu0 0
    %1139 = vmatprep.subr.bf16.mxu0 0
    %1140 = vmatpush1.bf16.xpose.msra.mxu0 0
    %1141 = vmatprep.subr.bf16.mxu0 0
    %1142 = vmatpush1.bf16.xpose.msra.mxu0 0
    %1143 = vmatprep.subr.bf16.mxu0 0
    %1144 = vmatpush1.bf16.xpose.msra.mxu0 0
    %1145 = vmatprep.mubr.bf16.mxu0 0
    %1146 = vmatmul.mubr.bf16.gmra.mrb[0].mxu0 %v1108
    %v1147 = vpop.f32.mrb[0].mxu0
    %v1148 = vadd.f32 0.0, %v1147
    %v1149 = vpop.f32.mrb[0].mxu0
    %v1150 = vpop.f32.mrb[0].mxu0
    %v1151 = vpop.f32.mrb[0].mxu0
    %1152 = vdwg.mxu0
    %v1153 = vsel %vm275, %v1098, -1e+30
    %v1154 = vsel %vm276, %v1148, -1e+30
    %v1155 = vsel %vm177, %v1153, -inf
    %1156 = vmax.xlane.f32.xlu0 %v1155
    %v1157 = vpop.xlane.xlu0 %1156
    %v1158 = vsel %vm177, %v1154, -inf
    %1159 = vmax.xlane.f32.xlu0 %v1158
    %v1160 = vpop.xlane.xlu0 %1159
    %v1161 = vsub.f32 %v1153, %v1157
    %v1162 = vsub.f32 %v1154, %v1160
    %v1163 = vmul.f32 %v1161, 1.442695
    %v1164 = vpow.pop %v1163
    %v1165 = vmul.f32 %v1162, 1.442695
    %v1166 = vpow.pop %v1165
    %v1167 = vsel %vm177, %v1164, 0.0
    %1168 = vadd.xlane.f32.xlu0 %v1167
    %v1169 = vpop.xlane.xlu0 %1168
    %v1170 = vsel %vm177, %v1166, 0.0
    %1171 = vadd.xlane.f32.xlu0 %v1170
    %v1172 = vpop.xlane.xlu0 %1171
    %v1173 = vrcp.pop %v1169
    %v1174 = vrcp.pop %v1172
    %v1175 = vmul.f32 %v1164, %v1173
    %v1176 = vmul.f32 %v1166, %v1174
    %v1177 = vadd.f32 %v885, %v1175
    %v1178 = vadd.f32 %v886, %v1176
    %v1179 = vsel %vm177, %v1175, 0.0
    %v1180 = vrot.slane %v1179, 4
    %v1181 = vadd.f32 %v1179, %v1180
    %v1182 = vrot.slane %v1181, 2
    %v1183 = vadd.f32 %v1181, %v1182
    %v1184 = vrot.slane %v1183, 1
    %v1185 = vadd.f32 %v1183, %v1184
    %v1186 = vsel %vm177, %v1176, 0.0
    %v1187 = vrot.slane %v1186, 4
    %v1188 = vadd.f32 %v1186, %v1187
    %v1189 = vrot.slane %v1188, 2
    %v1190 = vadd.f32 %v1188, %v1189
    %v1191 = vrot.slane %v1190, 1
    %v1192 = vadd.f32 %v1190, %v1191
    %1193 = vrot.lane.b32.xlu0 %v126, 40
    %v1194 = vpop.permute.xlu0 %1193
    %v1197 = vsel %vm177, %v1185, 0
    %1199 = vmatprep.subr.mxu0 0.0
    %1200 = vmatpush1.msra.mxu0 %v1194
    %1201 = vmatprep.subr.mxu0 0.0
    %1202 = vmatpush1.msra.mxu0 0.0
    %1203 = vmatprep.subr.mxu0 0.0
    %1204 = vmatpush1.msra.mxu0 0.0
    %1205 = vmatprep.subr.mxu0 0.0
    %1206 = vmatpush1.msra.mxu0 0.0
    %1207 = vmatprep.subr.mxu0 0.0
    %1208 = vmatpush1.msra.mxu0 0.0
    %1209 = vmatprep.subr.mxu0 0.0
    %1210 = vmatpush1.msra.mxu0 0.0
    %1211 = vmatprep.subr.mxu0 0.0
    %1212 = vmatpush1.msra.mxu0 0.0
    %1213 = vmatprep.subr.mxu0 0.0
    %1214 = vmatpush1.msra.mxu0 0.0
    %1215 = vmatprep.subr.mxu0 0.0
    %1216 = vmatpush1.msra.mxu0 0.0
    %1217 = vmatprep.subr.mxu0 0.0
    %1218 = vmatpush1.msra.mxu0 0.0
    %1219 = vmatprep.subr.mxu0 0.0
    %1220 = vmatpush1.msra.mxu0 0.0
    %1221 = vmatprep.subr.mxu0 0.0
    %1222 = vmatpush1.msra.mxu0 0.0
    %1223 = vmatprep.subr.mxu0 0.0
    %1224 = vmatpush1.msra.mxu0 0.0
    %1225 = vmatprep.subr.mxu0 0.0
    %1226 = vmatpush1.msra.mxu0 0.0
    %1227 = vmatprep.subr.mxu0 0.0
    %1228 = vmatpush1.msra.mxu0 0.0
    %1229 = vmatprep.subr.mxu0 0.0
    %1230 = vmatpush1.msra.mxu0 0.0
    %1231 = vmatprep.subr.mxu0 0.0
    %1232 = vmatpush1.msra.mxu0 0.0
    %1233 = vmatprep.subr.mxu0 0.0
    %1234 = vmatpush1.msra.mxu0 0.0
    %1235 = vmatprep.subr.mxu0 0.0
    %1236 = vmatpush1.msra.mxu0 0.0
    %1237 = vmatprep.subr.mxu0 0.0
    %1238 = vmatpush1.msra.mxu0 0.0
    %1239 = vmatprep.subr.mxu0 0.0
    %1240 = vmatpush1.msra.mxu0 0.0
    %1241 = vmatprep.subr.mxu0 0.0
    %1242 = vmatpush1.msra.mxu0 0.0
    %1243 = vmatprep.subr.mxu0 0.0
    %1244 = vmatpush1.msra.mxu0 0.0
    %1245 = vmatprep.subr.mxu0 0.0
    %1246 = vmatpush1.msra.mxu0 0.0
    %1247 = vmatprep.subr.mxu0 0.0
    %1248 = vmatpush1.msra.mxu0 0.0
    %1249 = vmatprep.subr.mxu0 0.0
    %1250 = vmatpush1.msra.mxu0 0.0
    %1251 = vmatprep.subr.mxu0 0.0
    %1252 = vmatpush1.msra.mxu0 0.0
    %1253 = vmatprep.subr.mxu0 0.0
    %1254 = vmatpush1.msra.mxu0 0.0
    %1255 = vmatprep.subr.mxu0 0.0
    %1256 = vmatpush1.msra.mxu0 0.0
    %1257 = vmatprep.subr.mxu0 0.0
    %1258 = vmatpush1.msra.mxu0 0.0
    %1259 = vmatprep.subr.mxu0 0.0
    %1260 = vmatpush1.msra.mxu0 0.0
    %1261 = vmatprep.subr.mxu0 0.0
    %1262 = vmatpush1.msra.mxu0 0.0
    %1263 = vmatprep.mubr.f32.mxu0 0.0
    %1264 = vmatmul.mubr.f32.gmra.mrb[0].mxu0 %v1197
    %v1265 = vpop.f32.mrb[0].mxu0
    %v1266 = vadd.f32 0.0, %v1265
    %v1267 = vpop.f32.mrb[0].mxu0
    %1268 = vdwg.mxu0
    %1269 = vrot.lane.b32.xlu0 %v129, 40
    %v1270 = vpop.permute.xlu0 %1269
    %v1273 = vsel %vm177, %v1192, 0
    %1275 = vmatprep.subr.mxu0 0.0
    %1276 = vmatpush1.msra.mxu0 %v1270
    %1277 = vmatprep.subr.mxu0 0.0
    %1278 = vmatpush1.msra.mxu0 0.0
    %1279 = vmatprep.subr.mxu0 0.0
    %1280 = vmatpush1.msra.mxu0 0.0
    %1281 = vmatprep.subr.mxu0 0.0
    %1282 = vmatpush1.msra.mxu0 0.0
    %1283 = vmatprep.subr.mxu0 0.0
    %1284 = vmatpush1.msra.mxu0 0.0
    %1285 = vmatprep.subr.mxu0 0.0
    %1286 = vmatpush1.msra.mxu0 0.0
    %1287 = vmatprep.subr.mxu0 0.0
    %1288 = vmatpush1.msra.mxu0 0.0
    %1289 = vmatprep.subr.mxu0 0.0
    %1290 = vmatpush1.msra.mxu0 0.0
    %1291 = vmatprep.subr.mxu0 0.0
    %1292 = vmatpush1.msra.mxu0 0.0
    %1293 = vmatprep.subr.mxu0 0.0
    %1294 = vmatpush1.msra.mxu0 0.0
    %1295 = vmatprep.subr.mxu0 0.0
    %1296 = vmatpush1.msra.mxu0 0.0
    %1297 = vmatprep.subr.mxu0 0.0
    %1298 = vmatpush1.msra.mxu0 0.0
    %1299 = vmatprep.subr.mxu0 0.0
    %1300 = vmatpush1.msra.mxu0 0.0
    %1301 = vmatprep.subr.mxu0 0.0
    %1302 = vmatpush1.msra.mxu0 0.0
    %1303 = vmatprep.subr.mxu0 0.0
    %1304 = vmatpush1.msra.mxu0 0.0
    %1305 = vmatprep.subr.mxu0 0.0
    %1306 = vmatpush1.msra.mxu0 0.0
    %1307 = vmatprep.subr.mxu0 0.0
    %1308 = vmatpush1.msra.mxu0 0.0
    %1309 = vmatprep.subr.mxu0 0.0
    %1310 = vmatpush1.msra.mxu0 0.0
    %1311 = vmatprep.subr.mxu0 0.0
    %1312 = vmatpush1.msra.mxu0 0.0
    %1313 = vmatprep.subr.mxu0 0.0
    %1314 = vmatpush1.msra.mxu0 0.0
    %1315 = vmatprep.subr.mxu0 0.0
    %1316 = vmatpush1.msra.mxu0 0.0
    %1317 = vmatprep.subr.mxu0 0.0
    %1318 = vmatpush1.msra.mxu0 0.0
    %1319 = vmatprep.subr.mxu0 0.0
    %1320 = vmatpush1.msra.mxu0 0.0
    %1321 = vmatprep.subr.mxu0 0.0
    %1322 = vmatpush1.msra.mxu0 0.0
    %1323 = vmatprep.subr.mxu0 0.0
    %1324 = vmatpush1.msra.mxu0 0.0
    %1325 = vmatprep.subr.mxu0 0.0
    %1326 = vmatpush1.msra.mxu0 0.0
    %1327 = vmatprep.subr.mxu0 0.0
    %1328 = vmatpush1.msra.mxu0 0.0
    %1329 = vmatprep.subr.mxu0 0.0
    %1330 = vmatpush1.msra.mxu0 0.0
    %1331 = vmatprep.subr.mxu0 0.0
    %1332 = vmatpush1.msra.mxu0 0.0
    %1333 = vmatprep.subr.mxu0 0.0
    %1334 = vmatpush1.msra.mxu0 0.0
    %1335 = vmatprep.subr.mxu0 0.0
    %1336 = vmatpush1.msra.mxu0 0.0
    %1337 = vmatprep.subr.mxu0 0.0
    %1338 = vmatpush1.msra.mxu0 0.0
    %1339 = vmatprep.mubr.f32.mxu0 0.0
    %1340 = vmatmul.mubr.f32.gmra.mrb[0].mxu0 %v1273
    %v1341 = vpop.f32.mrb[0].mxu0
    %v1342 = vadd.f32 0.0, %v1341
    %v1343 = vpop.f32.mrb[0].mxu0
    %1344 = vdwg.mxu0
    %v1345 = vmul.f32 %v1177, 0.25
    %v1346 = vmul.f32 %v1178, 0.25
    %1347 = vst.msk [vmem:[#allocation8] sm:$0xff] %vm177, %v1345
    %1348 = vst.msk [vmem:[#allocation8 + $0x8] sm:$0xff] %vm177, %v1346
    %1351 = vrot.lane.b32.xlu0 %v682, 8
    %v1352 = vpop.permute.xlu0 %1351
    %1353 = vrot.lane.b32.xlu0 %v758, 8
    %v1354 = vpop.permute.xlu0 %1353
    %1359 = vrot.lane.b32.xlu0 %v974, 16
    %v1360 = vpop.permute.xlu0 %1359
    %1361 = vrot.lane.b32.xlu0 %v1050, 16
    %v1362 = vpop.permute.xlu0 %1361
    %1367 = vrot.lane.b32.xlu0 %v1266, 24
    %v1368 = vpop.permute.xlu0 %1367
    %1369 = vrot.lane.b32.xlu0 %v1342, 24
    %v1370 = vpop.permute.xlu0 %1369
    %v1373 = vsel %vm177, %v389, %v1352
    %v1374 = vsel %vm177, %v466, %v1354
    %vm1375 = vcmask 130048
    %v1376 = vsel %vm1375, %v1373, %v1360
    %v1377 = vsel %vm1375, %v1374, %v1362
    %vm1378 = vcmask 195584
    %v1379 = vsel %vm1378, %v1376, %v1368
    %v1380 = vsel %vm1378, %v1377, %v1370
    %v1381 = vpack.c.bf16 %v1379, %v1379
    %v1382 = vpack.c.bf16 %v1380, %v1380
    %v1383 = vld [vmem:[%s4] sm:$0xf]
    %v1384 = vld [vmem:[%s4 + $0x4] sm:$0xf]
    %v1385 = vld [vmem:[%s4 + $0x8] sm:$0xf]
    %v1386 = vld [vmem:[%s4 + $0xc] sm:$0xf]
    %v1387 = vld [vmem:[%s5] sm:$0x1]
    %v1388 = vmul.f32 %v1387, 8.0
    %v1390 = vlaneseq
    %v1391 = vshrl.u32 %v1390, 7
    %v1392 = vsub.s32 0, %v1391
    %v1393 = vrot.slane %v1388, %v1392
    %v1397 = vunpack.c.l.b16 %v1381
    %v1398 = vunpack.c.l.b16 %v1382
    %v1399 = vrot.slane %v1398, 7
    %vm1400 = vcmask 1041409
    %v1401 = vsel %vm1400, %v1399, %v1397
    %v1402 = vpack.c.b16 %v1401, %v1401
    %v1407 = vunpack.c.l.b16 %v1383
    %v1408 = vunpack.c.l.b16 %v1384
    %v1409 = vunpack.c.l.b16 %v1385
    %v1410 = vunpack.c.l.b16 %v1386
    %v1411 = vpack.c.b16 %v1408, %v1407
    %v1412 = vpack.c.b16 %v1410, %v1409
    %v1416 = vsel %vm87, %v1402, 0
    %1418 = vmatprep.subr.bf16.mxu0 0
    %1419 = vmatpush1.bf16.msra.mxu0 %v1411
    %1420 = vmatprep.subr.bf16.mxu0 0
    %1421 = vmatpush1.bf16.msra.mxu0 %v1412
    %1422 = vmatprep.subr.bf16.mxu0 0
    %1423 = vmatpush1.bf16.msra.mxu0 0
    %1424 = vmatprep.subr.bf16.mxu0 0
    %1425 = vmatpush1.bf16.msra.mxu0 0
    %1426 = vmatprep.subr.bf16.mxu0 0
    %1427 = vmatpush1.bf16.msra.mxu0 0
    %1428 = vmatprep.subr.bf16.mxu0 0
    %1429 = vmatpush1.bf16.msra.mxu0 0
    %1430 = vmatprep.subr.bf16.mxu0 0
    %1431 = vmatpush1.bf16.msra.mxu0 0
    %1432 = vmatprep.subr.bf16.mxu0 0
    %1433 = vmatpush1.bf16.msra.mxu0 0
    %1434 = vmatprep.subr.bf16.mxu0 0
    %1435 = vmatpush1.bf16.msra.mxu0 0
    %1436 = vmatprep.subr.bf16.mxu0 0
    %1437 = vmatpush1.bf16.msra.mxu0 0
    %1438 = vmatprep.subr.bf16.mxu0 0
    %1439 = vmatpush1.bf16.msra.mxu0 0
    %1440 = vmatprep.subr.bf16.mxu0 0
    %1441 = vmatpush1.bf16.msra.mxu0 0
    %1442 = vmatprep.subr.bf16.mxu0 0
    %1443 = vmatpush1.bf16.msra.mxu0 0
    %1444 = vmatprep.subr.bf16.mxu0 0
    %1445 = vmatpush1.bf16.msra.mxu0 0
    %1446 = vmatprep.subr.bf16.mxu0 0
    %1447 = vmatpush1.bf16.msra.mxu0 0
    %1448 = vmatprep.subr.bf16.mxu0 0
    %1449 = vmatpush1.bf16.msra.mxu0 0
    %1450 = vmatprep.mubr.bf16.mxu0 0
    %1451 = vmatmul.mubr.bf16.gmra.mrb[0].mxu0 %v1416
    %v1452 = vpop.f32.mrb[0].mxu0
    %v1453 = vadd.f32 %v1393, %v1452
    %v1454 = vpop.f32.mrb[0].mxu0
    %v1455 = vpop.f32.mrb[0].mxu0
    %v1456 = vpop.f32.mrb[0].mxu0
    %1457 = vdwg.mxu0
    %v1458 = vcvt.s32.f32 %v56
    %1460 = vset.pattern.permute.xlu0 0
    %1461 = vperm.xlu0 %1460, %v1458
    %v1462 = vpop.permute.xlu0 %1461
    %v1464 = vrcp.pop %v1462
    %v1465 = vmul.f32 %v1453, %v1464
    %vm1466 = vcmask 254976
    %1467 = vst.msk [vmem:[#allocation7] sm:$0x3] %vm1466, %v1465
    // Predicated region
    $region34: #{tpu_custom_call.1} parent=1 // pred_check
      _
    $region35: #{tpu_custom_call.1} parent=1 // pred_check_branch
      %1469 = sbr.rel (0) target = $region37
    $region36: #{tpu_custom_call.1} parent=1 // pred_region
      %s1471 = ssub.s32 32, 32
      %1472 = vsyncadd [#allocation4], %s1471
      %s1474 = sshll.u32 [#allocation7], 4
      %s1475 = int_to_ptr.vmem [resolvable:$true] %s1474
      %1477 = dma.vmem_to_hbm [thread:$0]  %s1475, 32, %s6, [#allocation4]
    $region37: #{tpu_custom_call.1} parent=1 // pred_fallthru
      _
    // Predicated region
    $region38: #{tpu_custom_call.1} parent=1 // pred_check
      _
    $region39: #{tpu_custom_call.1} parent=1 // pred_check_branch
      %1479 = sbr.rel (0) target = $region41
    $region40: #{tpu_custom_call.1} parent=1 // pred_region
      %s1481 = ssub.s32 256, 256
      %1482 = vsyncadd [#allocation9], %s1481
      %s1483 = sshll.u32 [#allocation8], 4
      %s1484 = int_to_ptr.vmem [resolvable:$true] %s1483
      %1489 = dma.vmem_to_hbm [thread:$0]  %s1484, 256, %s7, [#allocation9], 128, 128, 8
    $region41: #{tpu_custom_call.1} parent=1 // pred_fallthru
      _
    // Predicated region
    $region42: #{tpu_custom_call.1} parent=1 // pred_check
      _
    $region43: #{tpu_custom_call.1} parent=1 // pred_check_branch
      %1491 = sbr.rel (0) target = $region45
    $region44: #{tpu_custom_call.1} parent=1 // pred_region
      %1492 = dma.done [#allocation4], 32
    $region45: #{tpu_custom_call.1} parent=1 // pred_fallthru
      _
    // Predicated region
    $region46: #{tpu_custom_call.1} parent=1 // pred_check
      _
    $region47: #{tpu_custom_call.1} parent=1 // pred_check_branch
      %1494 = sbr.rel (0) target = $region49
    $region48: #{tpu_custom_call.1} parent=1 // pred_region
      %1495 = dma.done [#allocation9], 256
    $region49: #{tpu_custom_call.1} parent=1 // pred_fallthru
      _
    %1496 = vsyncpa [#allocation3], 1
    %1497 = vsyncpa [#allocation6], 1
    %1498 = vsyncpa [#allocation4], 1
    %1499 = vsyncpa [#allocation9], 1

</llo_original>
